<compile_context>
chip_gen: v7x
topology: tpu7x:2x2x1
jax: 0.10.0
libtpu: 0.0.40
codegen_flags: <defaults>
</compile_context>

<pallas_src>
import jax
import jax.numpy as jnp
from jax.experimental import pallas as pl
from jax.experimental.pallas import tpu as pltpu

INPUT_DIM = 10
HIDDEN_DIM = 64
HEAD_HIDDEN = 32
N_VOL = 4
N_REG = 3
HEAD_OUT = 8  # padded fused-head output width (4 vol + 3 regime + 1 pad)


def garch_lstm_kernel(
    x_ref,        # (T*Bp, D)  time-major, batch padded to Bp, flattened
    wx_ref,       # (D, 8H)    Wih0 scattered into layer-0 gate columns (rest 0)
    bx_ref,       # (1, 8H)    b0 at layer-0 gate columns, zeros elsewhere
    wc_ref,       # (2H, 8H)   fused recurrent weight [[Whh0, Wih1],[0, Whh1]]
    b1_ref,       # (1, 8H)    b1 at layer-1 gate columns, zeros elsewhere
    hw1_ref, hb1_ref, hw2_ref, hb2_ref,   # fused heads: (H,64),(1,64),(64,8),(1,8)
    out_ref,      # (Bp, 8)    [vol(4) | reg(3) | pad(1)]
    bias_scr,     # VMEM (T+1, Bp, 8H): per-step gate bias, time-major
):
    TB, _ = x_ref.shape
    Bp = out_ref.shape[0]
    T = TB // Bp
    G8 = wc_ref.shape[1]          # 8H = 512
    H = G8 // 8                   # 64
    S6 = 6 * H                    # sigmoid region width: [i0 i1 f0 f1 o0 o1]
    f32 = jnp.float32

    # --- Hoisted layer-0 input projection for all T steps (off critical path).
    # Layer-1 gate columns of `proj` are exactly zero (wx/bx are zero there).
    proj = jnp.dot(x_ref[...], wx_ref[...], preferred_element_type=f32) + bx_ref[...]

    b1b = jnp.broadcast_to(b1_ref[...], (Bp, G8))        # hoisted broadcast
    for s in range(1, T):                                # steps 1..T-1: xproj(s) + b1
        bias_scr[s] = proj[s * Bp:(s + 1) * Bp, :] + b1b
    bias_scr[T] = b1b                                    # epilogue step: layer-1 only

    # --- Step 0 (h0(-1)=c0(-1)=h1(-1)=c1(-1)=0): no matmul needed.
    # Layer-1 gate columns are exactly 0 here -> sigmoid(0)*tanh(0) keeps that
    # half of the packed state at exactly 0 (i.e. h1(-1)=c1(-1)=0).
    gates = proj[:Bp, :]
    sig = jax.nn.sigmoid(gates[:, :S6])
    tg = jnp.tanh(gates[:, S6:])
    i_p = sig[:, :2 * H]
    o_p = sig[:, 4 * H:]
    c = i_p * tg                          # c_prev == 0
    h = o_p * jnp.tanh(c)                 # packed state [h0(0) | h1(-1)=0]

    # --- Wavefront recurrence: iteration s computes layer-0 step s and
    # layer-1 step s-1 from ONE fused matmul on [h0(s-1) | h1(s-2)].
    for s in range(1, T + 1):
        fused = jnp.dot(h, wc_ref[...], preferred_element_type=f32)   # (Bp, 8H)
        gates = fused + bias_scr[s]
        sig = jax.nn.sigmoid(gates[:, :S6])        # one EUP push for both layers
        tg = jnp.tanh(gates[:, S6:])               # one EUP push for both layers
        i_p = sig[:, :2 * H]                       # [i0 | i1]
        f_p = sig[:, 2 * H:4 * H]                  # [f0 | f1]
        o_p = sig[:, 4 * H:]                       # [o0 | o1]
        c = f_p * c + i_p * tg                     # packed [c0 | c1] update
        h = o_p * jnp.tanh(c)                      # packed [h0 | h1] update
    # TODO(synk): inter-layer dropout(0.2) is identity in eval mode.

    final_hidden = h[:, H:]                        # h1(T-1)  == hidden[-1]

    # --- Fused heads: one (Bp,64)@(64,64) + ReLU, one block-diagonal (64,8).
    head = jnp.maximum(
        jnp.dot(final_hidden, hw1_ref[...], preferred_element_type=f32)
        + hb1_ref[...],
        0.0,
    )
    out_ref[...] = (
        jnp.dot(head, hw2_ref[...], preferred_element_type=f32) + hb2_ref[...]
    )


def init_params(key):
    """Deterministic parameter init mimicking PyTorch shapes (transposed, gate
    order i,f,g,o like nn.LSTM). These are the 'reference layout' params."""
    H, D = HIDDEN_DIM, INPUT_DIM
    bound = 1.0 / jnp.sqrt(jnp.float32(H))
    ks = jax.random.split(key, 16)
    u = lambda k, shape: jax.random.uniform(
        k, shape, jnp.float32, minval=-bound, maxval=bound
    )
    return dict(
        wih0=u(ks[0], (D, 4 * H)),
        whh0=u(ks[1], (H, 4 * H)),
        b0=(u(ks[2], (1, 4 * H)) + u(ks[3], (1, 4 * H))),   # b_ih + b_hh
        wih1=u(ks[4], (H, 4 * H)),
        whh1=u(ks[5], (H, 4 * H)),
        b1=(u(ks[6], (1, 4 * H)) + u(ks[7], (1, 4 * H))),
        vw1=u(ks[8], (H, HEAD_HIDDEN)),
        vb1=u(ks[9], (1, HEAD_HIDDEN)),
        vw2=u(ks[10], (HEAD_HIDDEN, N_VOL)),
        vb2=u(ks[11], (1, N_VOL)),
        rw1=u(ks[12], (H, HEAD_HIDDEN)),
        rb1=u(ks[13], (1, HEAD_HIDDEN)),
        rw2=u(ks[14], (HEAD_HIDDEN, N_REG)),
        rb2=u(ks[15], (1, N_REG)),
    )


def pack_params(params):
    """One-time repack into the kernel layout:
    gate columns scattered into the fused order [i0 i1 f0 f1 o0 o1 g0 g1];
    recurrent weights of both layers fused into W_comb = [[Whh0,Wih1],[0,Whh1]];
    heads fused (first layers concatenated, second layer block-diagonal)."""
    H = HIDDEN_DIM
    G8 = 8 * H

    def place(dst, w4, layer):
        # w4 columns are torch-ordered [i | f | g | o], each H wide.
        i_ = w4[..., 0 * H:1 * H]
        f_ = w4[..., 1 * H:2 * H]
        g_ = w4[..., 2 * H:3 * H]
        o_ = w4[..., 3 * H:4 * H]
        off = layer * H
        dst = dst.at[..., 0 * 2 * H + off: 0 * 2 * H + off + H].set(i_)
        dst = dst.at[..., 1 * 2 * H + off: 1 * 2 * H + off + H].set(f_)
        dst = dst.at[..., 2 * 2 * H + off: 2 * 2 * H + off + H].set(o_)
        dst = dst.at[..., 3 * 2 * H + off: 3 * 2 * H + off + H].set(g_)
        return dst

    D = params["wih0"].shape[0]
    wx = place(jnp.zeros((D, G8), jnp.float32), params["wih0"], 0)
    bx = place(jnp.zeros((1, G8), jnp.float32), params["b0"], 0)

    top = place(jnp.zeros((H, G8), jnp.float32), params["whh0"], 0)   # h0 -> L0 gates
    top = place(top, params["wih1"], 1)                               # h0 -> L1 gates
    bot = place(jnp.zeros((H, G8), jnp.float32), params["whh1"], 1)   # h1 -> L1 gates
    w_comb = jnp.concatenate([top, bot], axis=0)                      # (2H, 8H)
    b1 = place(jnp.zeros((1, G8), jnp.float32), params["b1"], 1)

    head_w1 = jnp.concatenate([params["vw1"], params["rw1"]], axis=1)  # (H, 64)
    head_b1 = jnp.concatenate([params["vb1"], params["rb1"]], axis=1)  # (1, 64)
    head_w2 = jnp.zeros((2 * HEAD_HIDDEN, HEAD_OUT), jnp.float32)
    head_w2 = head_w2.at[:HEAD_HIDDEN, :N_VOL].set(params["vw2"])
    head_w2 = head_w2.at[HEAD_HIDDEN:, N_VOL:N_VOL + N_REG].set(params["rw2"])
    head_b2 = jnp.zeros((1, HEAD_OUT), jnp.float32)
    head_b2 = head_b2.at[:, :N_VOL].set(params["vb2"])
    head_b2 = head_b2.at[:, N_VOL:N_VOL + N_REG].set(params["rb2"])

    return dict(wx=wx, bx=bx, w_comb=w_comb, b1=b1,
                head_w1=head_w1, head_b1=head_b1,
                head_w2=head_w2, head_b2=head_b2)


@jax.jit
def garch_lstm_forward(x_btd, packed):
    """x_btd: (B, T, D) batch-first, like the PyTorch module.
    packed: output of pack_params()."""
    B, T, D = x_btd.shape
    Bp = ((B + 7) // 8) * 8                     # pad batch to a full sublane tile
    x = x_btd.astype(jnp.float32)
    x_pad = jnp.zeros((Bp, T, D), jnp.float32).at[:B, :, :].set(x)
    x_tm = jnp.transpose(x_pad, (1, 0, 2)).reshape(T * Bp, D)   # time-major, flat

    vmem = pl.BlockSpec(memory_space=pltpu.MemorySpace.VMEM)
    arg_order = ["wx", "bx", "w_comb", "b1",
                 "head_w1", "head_b1", "head_w2", "head_b2"]
    args = [x_tm] + [packed[k] for k in arg_order]

    out = pl.pallas_call(
        garch_lstm_kernel,
        out_shape=jax.ShapeDtypeStruct((Bp, HEAD_OUT), jnp.float32),
        in_specs=[vmem] * len(args),
        out_specs=vmem,
        scratch_shapes=[pltpu.VMEM((T + 1, Bp, 8 * HIDDEN_DIM), jnp.float32)],
    )(*args)

    vol = out[:B, :N_VOL]
    reg = out[:B, N_VOL:N_VOL + N_REG]
    return vol, reg


def reference_forward(x_btd, params):
    """Pure-JAX reference (original i,f,g,o layout) for sanity checking."""
    H = HIDDEN_DIM
    B, T, D = x_btd.shape
    x = jnp.transpose(x_btd, (1, 0, 2)).astype(jnp.float32)

    def cell(xt, h, c, wih, whh, b):
        g = xt @ wih + h @ whh + b
        i = jax.nn.sigmoid(g[:, 0:H])
        f = jax.nn.sigmoid(g[:, H:2 * H])
        gg = jnp.tanh(g[:, 2 * H:3 * H])
        o = jax.nn.sigmoid(g[:, 3 * H:4 * H])
        c = f * c + i * gg
        return o * jnp.tanh(c), c

    h0 = c0 = h1 = c1 = jnp.zeros((B, H), jnp.float32)
    for t in range(T):
        h0, c0 = cell(x[t], h0, c0, params["wih0"], params["whh0"], params["b0"])
        h1, c1 = cell(h0, h1, c1, params["wih1"], params["whh1"], params["b1"])
    v = jnp.maximum(h1 @ params["vw1"] + params["vb1"], 0.0)
    vol = v @ params["vw2"] + params["vb2"]
    r = jnp.maximum(h1 @ params["rw1"] + params["rb1"], 0.0)
    reg = r @ params["rw2"] + params["rb2"]
    return vol, reg


if __name__ == "__main__":
    key = jax.random.PRNGKey(0)
    k_x, k_p = jax.random.split(key)

    B, T = 2, 8
    x = jax.random.normal(k_x, (B, T, INPUT_DIM), jnp.float32)
    params = init_params(k_p)
    packed = pack_params(params)          # one-time weight repack (outside jit)

    vol, reg = garch_lstm_forward(x, packed)
    vol, reg = jax.block_until_ready((vol, reg))

    ref_vol, ref_reg = reference_forward(x, params)
    assert vol.shape == (B, N_VOL) and reg.shape == (B, N_REG)
    assert jnp.allclose(vol, ref_vol, atol=1e-4, rtol=1e-4)
    assert jnp.allclose(reg, ref_reg, atol=1e-4, rtol=1e-4)

    print("KERNEL_OK")
</pallas_src>

<mosaic_0001>
module attributes {stable_mosaic.version = 11 : i64} {
  func.func @garch_lstm_kernel(%arg0: memref<64x10xf32, #tpu.memory_space<vmem>>, %arg1: memref<10x512xf32, #tpu.memory_space<vmem>>, %arg2: memref<1x512xf32, #tpu.memory_space<vmem>>, %arg3: memref<128x512xf32, #tpu.memory_space<vmem>>, %arg4: memref<1x512xf32, #tpu.memory_space<vmem>>, %arg5: memref<64x64xf32, #tpu.memory_space<vmem>>, %arg6: memref<1x64xf32, #tpu.memory_space<vmem>>, %arg7: memref<64x8xf32, #tpu.memory_space<vmem>>, %arg8: memref<1x8xf32, #tpu.memory_space<vmem>>, %arg9: memref<8x8xf32, #tpu.memory_space<vmem>>, %arg10: memref<9x8x512xf32, #tpu.memory_space<vmem>>) attributes {dimension_semantics = [], scalar_prefetch = 0 : i64, scratch_operands = 1 : i64, tpu.core_type = #tpu.core_type<tc>} {
    %c0 = arith.constant 0 : index
    %c0_0 = arith.constant 0 : index
    %0 = vector.load %arg0[%c0, %c0_0] : memref<64x10xf32, #tpu.memory_space<vmem>>, vector<64x10xf32>
    %c0_1 = arith.constant 0 : index
    %c0_2 = arith.constant 0 : index
    %1 = vector.load %arg1[%c0_1, %c0_2] : memref<10x512xf32, #tpu.memory_space<vmem>>, vector<10x512xf32>
    %cst = arith.constant dense<0.000000e+00> : vector<64x512xf32>
    %2 = tpu.matmul %0, %1, %cst {dimension_numbers = #tpu.dot_dimension_numbers<[1], [0], [0], [1], [0, 0, 1, 1], [], []>} : vector<64x10xf32>, vector<10x512xf32>, vector<64x512xf32> -> vector<64x512xf32>
    %c0_3 = arith.constant 0 : index
    %c0_4 = arith.constant 0 : index
    %3 = vector.load %arg2[%c0_3, %c0_4] : memref<1x512xf32, #tpu.memory_space<vmem>>, vector<1x512xf32>
    %4 = vector.broadcast %3 : vector<1x512xf32> to vector<64x512xf32>
    %5 = arith.addf %2, %4 : vector<64x512xf32>
    %c0_5 = arith.constant 0 : index
    %c0_6 = arith.constant 0 : index
    %6 = vector.load %arg4[%c0_5, %c0_6] : memref<1x512xf32, #tpu.memory_space<vmem>>, vector<1x512xf32>
    %7 = vector.shape_cast %6 : vector<1x512xf32> to vector<1x512xf32>
    %8 = vector.broadcast %7 : vector<1x512xf32> to vector<8x512xf32>
    %9 = vector.extract_strided_slice %5 {offsets = [8, 0], sizes = [8, 512], strides = [1, 1]} : vector<64x512xf32> to vector<8x512xf32>
    %10 = arith.addf %9, %8 : vector<8x512xf32>
    %c1 = arith.constant 1 : index
    %c0_7 = arith.constant 0 : index
    %c0_8 = arith.constant 0 : index
    %11 = vector.load %arg10[%c1, %c0_7, %c0_8] : memref<9x8x512xf32, #tpu.memory_space<vmem>>, vector<1x8x512xf32>
    %12 = vector.shape_cast %11 : vector<1x8x512xf32> to vector<8x512xf32>
    %13 = vector.shape_cast %10 : vector<8x512xf32> to vector<1x8x512xf32>
    tpu.vector_store %arg10[%c1, %c0_7, %c0_8], %13 {strides = array<i32>} : memref<9x8x512xf32, #tpu.memory_space<vmem>>, vector<1x8x512xf32>,
    %14 = vector.extract_strided_slice %5 {offsets = [16, 0], sizes = [8, 512], strides = [1, 1]} : vector<64x512xf32> to vector<8x512xf32>
    %15 = arith.addf %14, %8 : vector<8x512xf32>
    %c2 = arith.constant 2 : index
    %c0_9 = arith.constant 0 : index
    %c0_10 = arith.constant 0 : index
    %16 = vector.load %arg10[%c2, %c0_9, %c0_10] : memref<9x8x512xf32, #tpu.memory_space<vmem>>, vector<1x8x512xf32>
    %17 = vector.shape_cast %16 : vector<1x8x512xf32> to vector<8x512xf32>
    %18 = vector.shape_cast %15 : vector<8x512xf32> to vector<1x8x512xf32>
    tpu.vector_store %arg10[%c2, %c0_9, %c0_10], %18 {strides = array<i32>} : memref<9x8x512xf32, #tpu.memory_space<vmem>>, vector<1x8x512xf32>,
    %19 = vector.extract_strided_slice %5 {offsets = [24, 0], sizes = [8, 512], strides = [1, 1]} : vector<64x512xf32> to vector<8x512xf32>
    %20 = arith.addf %19, %8 : vector<8x512xf32>
    %c3 = arith.constant 3 : index
    %c0_11 = arith.constant 0 : index
    %c0_12 = arith.constant 0 : index
    %21 = vector.load %arg10[%c3, %c0_11, %c0_12] : memref<9x8x512xf32, #tpu.memory_space<vmem>>, vector<1x8x512xf32>
    %22 = vector.shape_cast %21 : vector<1x8x512xf32> to vector<8x512xf32>
    %23 = vector.shape_cast %20 : vector<8x512xf32> to vector<1x8x512xf32>
    tpu.vector_store %arg10[%c3, %c0_11, %c0_12], %23 {strides = array<i32>} : memref<9x8x512xf32, #tpu.memory_space<vmem>>, vector<1x8x512xf32>,
    %24 = vector.extract_strided_slice %5 {offsets = [32, 0], sizes = [8, 512], strides = [1, 1]} : vector<64x512xf32> to vector<8x512xf32>
    %25 = arith.addf %24, %8 : vector<8x512xf32>
    %c4 = arith.constant 4 : index
    %c0_13 = arith.constant 0 : index
    %c0_14 = arith.constant 0 : index
    %26 = vector.load %arg10[%c4, %c0_13, %c0_14] : memref<9x8x512xf32, #tpu.memory_space<vmem>>, vector<1x8x512xf32>
    %27 = vector.shape_cast %26 : vector<1x8x512xf32> to vector<8x512xf32>
    %28 = vector.shape_cast %25 : vector<8x512xf32> to vector<1x8x512xf32>
    tpu.vector_store %arg10[%c4, %c0_13, %c0_14], %28 {strides = array<i32>} : memref<9x8x512xf32, #tpu.memory_space<vmem>>, vector<1x8x512xf32>,
    %29 = vector.extract_strided_slice %5 {offsets = [40, 0], sizes = [8, 512], strides = [1, 1]} : vector<64x512xf32> to vector<8x512xf32>
    %30 = arith.addf %29, %8 : vector<8x512xf32>
    %c5 = arith.constant 5 : index
    %c0_15 = arith.constant 0 : index
    %c0_16 = arith.constant 0 : index
    %31 = vector.load %arg10[%c5, %c0_15, %c0_16] : memref<9x8x512xf32, #tpu.memory_space<vmem>>, vector<1x8x512xf32>
    %32 = vector.shape_cast %31 : vector<1x8x512xf32> to vector<8x512xf32>
    %33 = vector.shape_cast %30 : vector<8x512xf32> to vector<1x8x512xf32>
    tpu.vector_store %arg10[%c5, %c0_15, %c0_16], %33 {strides = array<i32>} : memref<9x8x512xf32, #tpu.memory_space<vmem>>, vector<1x8x512xf32>,
    %34 = vector.extract_strided_slice %5 {offsets = [48, 0], sizes = [8, 512], strides = [1, 1]} : vector<64x512xf32> to vector<8x512xf32>
    %35 = arith.addf %34, %8 : vector<8x512xf32>
    %c6 = arith.constant 6 : index
    %c0_17 = arith.constant 0 : index
    %c0_18 = arith.constant 0 : index
    %36 = vector.load %arg10[%c6, %c0_17, %c0_18] : memref<9x8x512xf32, #tpu.memory_space<vmem>>, vector<1x8x512xf32>
    %37 = vector.shape_cast %36 : vector<1x8x512xf32> to vector<8x512xf32>
    %38 = vector.shape_cast %35 : vector<8x512xf32> to vector<1x8x512xf32>
    tpu.vector_store %arg10[%c6, %c0_17, %c0_18], %38 {strides = array<i32>} : memref<9x8x512xf32, #tpu.memory_space<vmem>>, vector<1x8x512xf32>,
    %39 = vector.extract_strided_slice %5 {offsets = [56, 0], sizes = [8, 512], strides = [1, 1]} : vector<64x512xf32> to vector<8x512xf32>
    %40 = arith.addf %39, %8 : vector<8x512xf32>
    %c7 = arith.constant 7 : index
    %c0_19 = arith.constant 0 : index
    %c0_20 = arith.constant 0 : index
    %41 = vector.load %arg10[%c7, %c0_19, %c0_20] : memref<9x8x512xf32, #tpu.memory_space<vmem>>, vector<1x8x512xf32>
    %42 = vector.shape_cast %41 : vector<1x8x512xf32> to vector<8x512xf32>
    %43 = vector.shape_cast %40 : vector<8x512xf32> to vector<1x8x512xf32>
    tpu.vector_store %arg10[%c7, %c0_19, %c0_20], %43 {strides = array<i32>} : memref<9x8x512xf32, #tpu.memory_space<vmem>>, vector<1x8x512xf32>,
    %c8 = arith.constant 8 : index
    %c0_21 = arith.constant 0 : index
    %c0_22 = arith.constant 0 : index
    %44 = vector.load %arg10[%c8, %c0_21, %c0_22] : memref<9x8x512xf32, #tpu.memory_space<vmem>>, vector<1x8x512xf32>
    %45 = vector.shape_cast %44 : vector<1x8x512xf32> to vector<8x512xf32>
    %46 = vector.shape_cast %8 : vector<8x512xf32> to vector<1x8x512xf32>
    tpu.vector_store %arg10[%c8, %c0_21, %c0_22], %46 {strides = array<i32>} : memref<9x8x512xf32, #tpu.memory_space<vmem>>, vector<1x8x512xf32>,
    %47 = vector.extract_strided_slice %5 {offsets = [0, 0], sizes = [8, 512], strides = [1, 1]} : vector<64x512xf32> to vector<8x512xf32>
    %48 = vector.extract_strided_slice %47 {offsets = [0, 0], sizes = [8, 384], strides = [1, 1]} : vector<8x512xf32> to vector<8x384xf32>
    %49 = arith.negf %48 : vector<8x384xf32>
    %50 = math.exp %49 : vector<8x384xf32>
    %cst_23 = arith.constant 1.000000e+00 : f32
    %51 = vector.broadcast %cst_23 : f32 to vector<8x384xf32>
    %52 = arith.addf %51, %50 : vector<8x384xf32>
    %53 = arith.divf %51, %52 : vector<8x384xf32>
    %54 = vector.extract_strided_slice %47 {offsets = [0, 384], sizes = [8, 128], strides = [1, 1]} : vector<8x512xf32> to vector<8x128xf32>
    %55 = math.tanh %54 : vector<8x128xf32>
    %56 = vector.extract_strided_slice %53 {offsets = [0, 0], sizes = [8, 128], strides = [1, 1]} : vector<8x384xf32> to vector<8x128xf32>
    %57 = vector.extract_strided_slice %53 {offsets = [0, 256], sizes = [8, 128], strides = [1, 1]} : vector<8x384xf32> to vector<8x128xf32>
    %58 = arith.mulf %56, %55 : vector<8x128xf32>
    %59 = math.tanh %58 : vector<8x128xf32>
    %60 = arith.mulf %57, %59 : vector<8x128xf32>
    %c0_24 = arith.constant 0 : index
    %c0_25 = arith.constant 0 : index
    %61 = vector.load %arg3[%c0_24, %c0_25] : memref<128x512xf32, #tpu.memory_space<vmem>>, vector<128x512xf32>
    %cst_26 = arith.constant dense<0.000000e+00> : vector<8x512xf32>
    %62 = tpu.matmul %60, %61, %cst_26 {dimension_numbers = #tpu.dot_dimension_numbers<[1], [0], [0], [1], [0, 0, 1, 1], [], []>} : vector<8x128xf32>, vector<128x512xf32>, vector<8x512xf32> -> vector<8x512xf32>
    %c1_27 = arith.constant 1 : index
    %c0_28 = arith.constant 0 : index
    %c0_29 = arith.constant 0 : index
    %63 = vector.load %arg10[%c1_27, %c0_28, %c0_29] : memref<9x8x512xf32, #tpu.memory_space<vmem>>, vector<1x8x512xf32>
    %64 = vector.shape_cast %63 : vector<1x8x512xf32> to vector<8x512xf32>
    %65 = arith.addf %62, %64 : vector<8x512xf32>
    %66 = vector.extract_strided_slice %65 {offsets = [0, 0], sizes = [8, 384], strides = [1, 1]} : vector<8x512xf32> to vector<8x384xf32>
    %67 = arith.negf %66 : vector<8x384xf32>
    %68 = math.exp %67 : vector<8x384xf32>
    %cst_30 = arith.constant 1.000000e+00 : f32
    %69 = vector.broadcast %cst_30 : f32 to vector<8x384xf32>
    %70 = arith.addf %69, %68 : vector<8x384xf32>
    %71 = arith.divf %69, %70 : vector<8x384xf32>
    %72 = vector.extract_strided_slice %65 {offsets = [0, 384], sizes = [8, 128], strides = [1, 1]} : vector<8x512xf32> to vector<8x128xf32>
    %73 = math.tanh %72 : vector<8x128xf32>
    %74 = vector.extract_strided_slice %71 {offsets = [0, 0], sizes = [8, 128], strides = [1, 1]} : vector<8x384xf32> to vector<8x128xf32>
    %75 = vector.extract_strided_slice %71 {offsets = [0, 128], sizes = [8, 128], strides = [1, 1]} : vector<8x384xf32> to vector<8x128xf32>
    %76 = vector.extract_strided_slice %71 {offsets = [0, 256], sizes = [8, 128], strides = [1, 1]} : vector<8x384xf32> to vector<8x128xf32>
    %77 = arith.mulf %75, %58 : vector<8x128xf32>
    %78 = arith.mulf %74, %73 : vector<8x128xf32>
    %79 = arith.addf %77, %78 : vector<8x128xf32>
    %80 = math.tanh %79 : vector<8x128xf32>
    %81 = arith.mulf %76, %80 : vector<8x128xf32>
    %c0_31 = arith.constant 0 : index
    %c0_32 = arith.constant 0 : index
    %82 = vector.load %arg3[%c0_31, %c0_32] : memref<128x512xf32, #tpu.memory_space<vmem>>, vector<128x512xf32>
    %cst_33 = arith.constant dense<0.000000e+00> : vector<8x512xf32>
    %83 = tpu.matmul %81, %82, %cst_33 {dimension_numbers = #tpu.dot_dimension_numbers<[1], [0], [0], [1], [0, 0, 1, 1], [], []>} : vector<8x128xf32>, vector<128x512xf32>, vector<8x512xf32> -> vector<8x512xf32>
    %c2_34 = arith.constant 2 : index
    %c0_35 = arith.constant 0 : index
    %c0_36 = arith.constant 0 : index
    %84 = vector.load %arg10[%c2_34, %c0_35, %c0_36] : memref<9x8x512xf32, #tpu.memory_space<vmem>>, vector<1x8x512xf32>
    %85 = vector.shape_cast %84 : vector<1x8x512xf32> to vector<8x512xf32>
    %86 = arith.addf %83, %85 : vector<8x512xf32>
    %87 = vector.extract_strided_slice %86 {offsets = [0, 0], sizes = [8, 384], strides = [1, 1]} : vector<8x512xf32> to vector<8x384xf32>
    %88 = arith.negf %87 : vector<8x384xf32>
    %89 = math.exp %88 : vector<8x384xf32>
    %cst_37 = arith.constant 1.000000e+00 : f32
    %90 = vector.broadcast %cst_37 : f32 to vector<8x384xf32>
    %91 = arith.addf %90, %89 : vector<8x384xf32>
    %92 = arith.divf %90, %91 : vector<8x384xf32>
    %93 = vector.extract_strided_slice %86 {offsets = [0, 384], sizes = [8, 128], strides = [1, 1]} : vector<8x512xf32> to vector<8x128xf32>
    %94 = math.tanh %93 : vector<8x128xf32>
    %95 = vector.extract_strided_slice %92 {offsets = [0, 0], sizes = [8, 128], strides = [1, 1]} : vector<8x384xf32> to vector<8x128xf32>
    %96 = vector.extract_strided_slice %92 {offsets = [0, 128], sizes = [8, 128], strides = [1, 1]} : vector<8x384xf32> to vector<8x128xf32>
    %97 = vector.extract_strided_slice %92 {offsets = [0, 256], sizes = [8, 128], strides = [1, 1]} : vector<8x384xf32> to vector<8x128xf32>
    %98 = arith.mulf %96, %79 : vector<8x128xf32>
    %99 = arith.mulf %95, %94 : vector<8x128xf32>
    %100 = arith.addf %98, %99 : vector<8x128xf32>
    %101 = math.tanh %100 : vector<8x128xf32>
    %102 = arith.mulf %97, %101 : vector<8x128xf32>
    %c0_38 = arith.constant 0 : index
    %c0_39 = arith.constant 0 : index
    %103 = vector.load %arg3[%c0_38, %c0_39] : memref<128x512xf32, #tpu.memory_space<vmem>>, vector<128x512xf32>
    %cst_40 = arith.constant dense<0.000000e+00> : vector<8x512xf32>
    %104 = tpu.matmul %102, %103, %cst_40 {dimension_numbers = #tpu.dot_dimension_numbers<[1], [0], [0], [1], [0, 0, 1, 1], [], []>} : vector<8x128xf32>, vector<128x512xf32>, vector<8x512xf32> -> vector<8x512xf32>
    %c3_41 = arith.constant 3 : index
    %c0_42 = arith.constant 0 : index
    %c0_43 = arith.constant 0 : index
    %105 = vector.load %arg10[%c3_41, %c0_42, %c0_43] : memref<9x8x512xf32, #tpu.memory_space<vmem>>, vector<1x8x512xf32>
    %106 = vector.shape_cast %105 : vector<1x8x512xf32> to vector<8x512xf32>
    %107 = arith.addf %104, %106 : vector<8x512xf32>
    %108 = vector.extract_strided_slice %107 {offsets = [0, 0], sizes = [8, 384], strides = [1, 1]} : vector<8x512xf32> to vector<8x384xf32>
    %109 = arith.negf %108 : vector<8x384xf32>
    %110 = math.exp %109 : vector<8x384xf32>
    %cst_44 = arith.constant 1.000000e+00 : f32
    %111 = vector.broadcast %cst_44 : f32 to vector<8x384xf32>
    %112 = arith.addf %111, %110 : vector<8x384xf32>
    %113 = arith.divf %111, %112 : vector<8x384xf32>
    %114 = vector.extract_strided_slice %107 {offsets = [0, 384], sizes = [8, 128], strides = [1, 1]} : vector<8x512xf32> to vector<8x128xf32>
    %115 = math.tanh %114 : vector<8x128xf32>
    %116 = vector.extract_strided_slice %113 {offsets = [0, 0], sizes = [8, 128], strides = [1, 1]} : vector<8x384xf32> to vector<8x128xf32>
    %117 = vector.extract_strided_slice %113 {offsets = [0, 128], sizes = [8, 128], strides = [1, 1]} : vector<8x384xf32> to vector<8x128xf32>
    %118 = vector.extract_strided_slice %113 {offsets = [0, 256], sizes = [8, 128], strides = [1, 1]} : vector<8x384xf32> to vector<8x128xf32>
    %119 = arith.mulf %117, %100 : vector<8x128xf32>
    %120 = arith.mulf %116, %115 : vector<8x128xf32>
    %121 = arith.addf %119, %120 : vector<8x128xf32>
    %122 = math.tanh %121 : vector<8x128xf32>
    %123 = arith.mulf %118, %122 : vector<8x128xf32>
    %c0_45 = arith.constant 0 : index
    %c0_46 = arith.constant 0 : index
    %124 = vector.load %arg3[%c0_45, %c0_46] : memref<128x512xf32, #tpu.memory_space<vmem>>, vector<128x512xf32>
    %cst_47 = arith.constant dense<0.000000e+00> : vector<8x512xf32>
    %125 = tpu.matmul %123, %124, %cst_47 {dimension_numbers = #tpu.dot_dimension_numbers<[1], [0], [0], [1], [0, 0, 1, 1], [], []>} : vector<8x128xf32>, vector<128x512xf32>, vector<8x512xf32> -> vector<8x512xf32>
    %c4_48 = arith.constant 4 : index
    %c0_49 = arith.constant 0 : index
    %c0_50 = arith.constant 0 : index
    %126 = vector.load %arg10[%c4_48, %c0_49, %c0_50] : memref<9x8x512xf32, #tpu.memory_space<vmem>>, vector<1x8x512xf32>
    %127 = vector.shape_cast %126 : vector<1x8x512xf32> to vector<8x512xf32>
    %128 = arith.addf %125, %127 : vector<8x512xf32>
    %129 = vector.extract_strided_slice %128 {offsets = [0, 0], sizes = [8, 384], strides = [1, 1]} : vector<8x512xf32> to vector<8x384xf32>
    %130 = arith.negf %129 : vector<8x384xf32>
    %131 = math.exp %130 : vector<8x384xf32>
    %cst_51 = arith.constant 1.000000e+00 : f32
    %132 = vector.broadcast %cst_51 : f32 to vector<8x384xf32>
    %133 = arith.addf %132, %131 : vector<8x384xf32>
    %134 = arith.divf %132, %133 : vector<8x384xf32>
    %135 = vector.extract_strided_slice %128 {offsets = [0, 384], sizes = [8, 128], strides = [1, 1]} : vector<8x512xf32> to vector<8x128xf32>
    %136 = math.tanh %135 : vector<8x128xf32>
    %137 = vector.extract_strided_slice %134 {offsets = [0, 0], sizes = [8, 128], strides = [1, 1]} : vector<8x384xf32> to vector<8x128xf32>
    %138 = vector.extract_strided_slice %134 {offsets = [0, 128], sizes = [8, 128], strides = [1, 1]} : vector<8x384xf32> to vector<8x128xf32>
    %139 = vector.extract_strided_slice %134 {offsets = [0, 256], sizes = [8, 128], strides = [1, 1]} : vector<8x384xf32> to vector<8x128xf32>
    %140 = arith.mulf %138, %121 : vector<8x128xf32>
    %141 = arith.mulf %137, %136 : vector<8x128xf32>
    %142 = arith.addf %140, %141 : vector<8x128xf32>
    %143 = math.tanh %142 : vector<8x128xf32>
    %144 = arith.mulf %139, %143 : vector<8x128xf32>
    %c0_52 = arith.constant 0 : index
    %c0_53 = arith.constant 0 : index
    %145 = vector.load %arg3[%c0_52, %c0_53] : memref<128x512xf32, #tpu.memory_space<vmem>>, vector<128x512xf32>
    %cst_54 = arith.constant dense<0.000000e+00> : vector<8x512xf32>
    %146 = tpu.matmul %144, %145, %cst_54 {dimension_numbers = #tpu.dot_dimension_numbers<[1], [0], [0], [1], [0, 0, 1, 1], [], []>} : vector<8x128xf32>, vector<128x512xf32>, vector<8x512xf32> -> vector<8x512xf32>
    %c5_55 = arith.constant 5 : index
    %c0_56 = arith.constant 0 : index
    %c0_57 = arith.constant 0 : index
    %147 = vector.load %arg10[%c5_55, %c0_56, %c0_57] : memref<9x8x512xf32, #tpu.memory_space<vmem>>, vector<1x8x512xf32>
    %148 = vector.shape_cast %147 : vector<1x8x512xf32> to vector<8x512xf32>
    %149 = arith.addf %146, %148 : vector<8x512xf32>
    %150 = vector.extract_strided_slice %149 {offsets = [0, 0], sizes = [8, 384], strides = [1, 1]} : vector<8x512xf32> to vector<8x384xf32>
    %151 = arith.negf %150 : vector<8x384xf32>
    %152 = math.exp %151 : vector<8x384xf32>
    %cst_58 = arith.constant 1.000000e+00 : f32
    %153 = vector.broadcast %cst_58 : f32 to vector<8x384xf32>
    %154 = arith.addf %153, %152 : vector<8x384xf32>
    %155 = arith.divf %153, %154 : vector<8x384xf32>
    %156 = vector.extract_strided_slice %149 {offsets = [0, 384], sizes = [8, 128], strides = [1, 1]} : vector<8x512xf32> to vector<8x128xf32>
    %157 = math.tanh %156 : vector<8x128xf32>
    %158 = vector.extract_strided_slice %155 {offsets = [0, 0], sizes = [8, 128], strides = [1, 1]} : vector<8x384xf32> to vector<8x128xf32>
    %159 = vector.extract_strided_slice %155 {offsets = [0, 128], sizes = [8, 128], strides = [1, 1]} : vector<8x384xf32> to vector<8x128xf32>
    %160 = vector.extract_strided_slice %155 {offsets = [0, 256], sizes = [8, 128], strides = [1, 1]} : vector<8x384xf32> to vector<8x128xf32>
    %161 = arith.mulf %159, %142 : vector<8x128xf32>
    %162 = arith.mulf %158, %157 : vector<8x128xf32>
    %163 = arith.addf %161, %162 : vector<8x128xf32>
    %164 = math.tanh %163 : vector<8x128xf32>
    %165 = arith.mulf %160, %164 : vector<8x128xf32>
    %c0_59 = arith.constant 0 : index
    %c0_60 = arith.constant 0 : index
    %166 = vector.load %arg3[%c0_59, %c0_60] : memref<128x512xf32, #tpu.memory_space<vmem>>, vector<128x512xf32>
    %cst_61 = arith.constant dense<0.000000e+00> : vector<8x512xf32>
    %167 = tpu.matmul %165, %166, %cst_61 {dimension_numbers = #tpu.dot_dimension_numbers<[1], [0], [0], [1], [0, 0, 1, 1], [], []>} : vector<8x128xf32>, vector<128x512xf32>, vector<8x512xf32> -> vector<8x512xf32>
    %c6_62 = arith.constant 6 : index
    %c0_63 = arith.constant 0 : index
    %c0_64 = arith.constant 0 : index
    %168 = vector.load %arg10[%c6_62, %c0_63, %c0_64] : memref<9x8x512xf32, #tpu.memory_space<vmem>>, vector<1x8x512xf32>
    %169 = vector.shape_cast %168 : vector<1x8x512xf32> to vector<8x512xf32>
    %170 = arith.addf %167, %169 : vector<8x512xf32>
    %171 = vector.extract_strided_slice %170 {offsets = [0, 0], sizes = [8, 384], strides = [1, 1]} : vector<8x512xf32> to vector<8x384xf32>
    %172 = arith.negf %171 : vector<8x384xf32>
    %173 = math.exp %172 : vector<8x384xf32>
    %cst_65 = arith.constant 1.000000e+00 : f32
    %174 = vector.broadcast %cst_65 : f32 to vector<8x384xf32>
    %175 = arith.addf %174, %173 : vector<8x384xf32>
    %176 = arith.divf %174, %175 : vector<8x384xf32>
    %177 = vector.extract_strided_slice %170 {offsets = [0, 384], sizes = [8, 128], strides = [1, 1]} : vector<8x512xf32> to vector<8x128xf32>
    %178 = math.tanh %177 : vector<8x128xf32>
    %179 = vector.extract_strided_slice %176 {offsets = [0, 0], sizes = [8, 128], strides = [1, 1]} : vector<8x384xf32> to vector<8x128xf32>
    %180 = vector.extract_strided_slice %176 {offsets = [0, 128], sizes = [8, 128], strides = [1, 1]} : vector<8x384xf32> to vector<8x128xf32>
    %181 = vector.extract_strided_slice %176 {offsets = [0, 256], sizes = [8, 128], strides = [1, 1]} : vector<8x384xf32> to vector<8x128xf32>
    %182 = arith.mulf %180, %163 : vector<8x128xf32>
    %183 = arith.mulf %179, %178 : vector<8x128xf32>
    %184 = arith.addf %182, %183 : vector<8x128xf32>
    %185 = math.tanh %184 : vector<8x128xf32>
    %186 = arith.mulf %181, %185 : vector<8x128xf32>
    %c0_66 = arith.constant 0 : index
    %c0_67 = arith.constant 0 : index
    %187 = vector.load %arg3[%c0_66, %c0_67] : memref<128x512xf32, #tpu.memory_space<vmem>>, vector<128x512xf32>
    %cst_68 = arith.constant dense<0.000000e+00> : vector<8x512xf32>
    %188 = tpu.matmul %186, %187, %cst_68 {dimension_numbers = #tpu.dot_dimension_numbers<[1], [0], [0], [1], [0, 0, 1, 1], [], []>} : vector<8x128xf32>, vector<128x512xf32>, vector<8x512xf32> -> vector<8x512xf32>
    %c7_69 = arith.constant 7 : index
    %c0_70 = arith.constant 0 : index
    %c0_71 = arith.constant 0 : index
    %189 = vector.load %arg10[%c7_69, %c0_70, %c0_71] : memref<9x8x512xf32, #tpu.memory_space<vmem>>, vector<1x8x512xf32>
    %190 = vector.shape_cast %189 : vector<1x8x512xf32> to vector<8x512xf32>
    %191 = arith.addf %188, %190 : vector<8x512xf32>
    %192 = vector.extract_strided_slice %191 {offsets = [0, 0], sizes = [8, 384], strides = [1, 1]} : vector<8x512xf32> to vector<8x384xf32>
    %193 = arith.negf %192 : vector<8x384xf32>
    %194 = math.exp %193 : vector<8x384xf32>
    %cst_72 = arith.constant 1.000000e+00 : f32
    %195 = vector.broadcast %cst_72 : f32 to vector<8x384xf32>
    %196 = arith.addf %195, %194 : vector<8x384xf32>
    %197 = arith.divf %195, %196 : vector<8x384xf32>
    %198 = vector.extract_strided_slice %191 {offsets = [0, 384], sizes = [8, 128], strides = [1, 1]} : vector<8x512xf32> to vector<8x128xf32>
    %199 = math.tanh %198 : vector<8x128xf32>
    %200 = vector.extract_strided_slice %197 {offsets = [0, 0], sizes = [8, 128], strides = [1, 1]} : vector<8x384xf32> to vector<8x128xf32>
    %201 = vector.extract_strided_slice %197 {offsets = [0, 128], sizes = [8, 128], strides = [1, 1]} : vector<8x384xf32> to vector<8x128xf32>
    %202 = vector.extract_strided_slice %197 {offsets = [0, 256], sizes = [8, 128], strides = [1, 1]} : vector<8x384xf32> to vector<8x128xf32>
    %203 = arith.mulf %201, %184 : vector<8x128xf32>
    %204 = arith.mulf %200, %199 : vector<8x128xf32>
    %205 = arith.addf %203, %204 : vector<8x128xf32>
    %206 = math.tanh %205 : vector<8x128xf32>
    %207 = arith.mulf %202, %206 : vector<8x128xf32>
    %c0_73 = arith.constant 0 : index
    %c0_74 = arith.constant 0 : index
    %208 = vector.load %arg3[%c0_73, %c0_74] : memref<128x512xf32, #tpu.memory_space<vmem>>, vector<128x512xf32>
    %cst_75 = arith.constant dense<0.000000e+00> : vector<8x512xf32>
    %209 = tpu.matmul %207, %208, %cst_75 {dimension_numbers = #tpu.dot_dimension_numbers<[1], [0], [0], [1], [0, 0, 1, 1], [], []>} : vector<8x128xf32>, vector<128x512xf32>, vector<8x512xf32> -> vector<8x512xf32>
    %c8_76 = arith.constant 8 : index
    %c0_77 = arith.constant 0 : index
    %c0_78 = arith.constant 0 : index
    %210 = vector.load %arg10[%c8_76, %c0_77, %c0_78] : memref<9x8x512xf32, #tpu.memory_space<vmem>>, vector<1x8x512xf32>
    %211 = vector.shape_cast %210 : vector<1x8x512xf32> to vector<8x512xf32>
    %212 = arith.addf %209, %211 : vector<8x512xf32>
    %213 = vector.extract_strided_slice %212 {offsets = [0, 0], sizes = [8, 384], strides = [1, 1]} : vector<8x512xf32> to vector<8x384xf32>
    %214 = arith.negf %213 : vector<8x384xf32>
    %215 = math.exp %214 : vector<8x384xf32>
    %cst_79 = arith.constant 1.000000e+00 : f32
    %216 = vector.broadcast %cst_79 : f32 to vector<8x384xf32>
    %217 = arith.addf %216, %215 : vector<8x384xf32>
    %218 = arith.divf %216, %217 : vector<8x384xf32>
    %219 = vector.extract_strided_slice %212 {offsets = [0, 384], sizes = [8, 128], strides = [1, 1]} : vector<8x512xf32> to vector<8x128xf32>
    %220 = math.tanh %219 : vector<8x128xf32>
    %221 = vector.extract_strided_slice %218 {offsets = [0, 0], sizes = [8, 128], strides = [1, 1]} : vector<8x384xf32> to vector<8x128xf32>
    %222 = vector.extract_strided_slice %218 {offsets = [0, 128], sizes = [8, 128], strides = [1, 1]} : vector<8x384xf32> to vector<8x128xf32>
    %223 = vector.extract_strided_slice %218 {offsets = [0, 256], sizes = [8, 128], strides = [1, 1]} : vector<8x384xf32> to vector<8x128xf32>
    %224 = arith.mulf %222, %205 : vector<8x128xf32>
    %225 = arith.mulf %221, %220 : vector<8x128xf32>
    %226 = arith.addf %224, %225 : vector<8x128xf32>
    %227 = math.tanh %226 : vector<8x128xf32>
    %228 = arith.mulf %223, %227 : vector<8x128xf32>
    %229 = vector.extract_strided_slice %228 {offsets = [0, 64], sizes = [8, 64], strides = [1, 1]} : vector<8x128xf32> to vector<8x64xf32>
    %c0_80 = arith.constant 0 : index
    %c0_81 = arith.constant 0 : index
    %230 = vector.load %arg5[%c0_80, %c0_81] : memref<64x64xf32, #tpu.memory_space<vmem>>, vector<64x64xf32>
    %cst_82 = arith.constant dense<0.000000e+00> : vector<8x64xf32>
    %231 = tpu.matmul %229, %230, %cst_82 {dimension_numbers = #tpu.dot_dimension_numbers<[1], [0], [0], [1], [0, 0, 1, 1], [], []>} : vector<8x64xf32>, vector<64x64xf32>, vector<8x64xf32> -> vector<8x64xf32>
    %c0_83 = arith.constant 0 : index
    %c0_84 = arith.constant 0 : index
    %232 = vector.load %arg6[%c0_83, %c0_84] : memref<1x64xf32, #tpu.memory_space<vmem>>, vector<1x64xf32>
    %233 = vector.broadcast %232 : vector<1x64xf32> to vector<8x64xf32>
    %234 = arith.addf %231, %233 : vector<8x64xf32>
    %cst_85 = arith.constant 0.000000e+00 : f32
    %235 = vector.broadcast %cst_85 : f32 to vector<8x64xf32>
    %236 = arith.maximumf %234, %235 : vector<8x64xf32>
    %c0_86 = arith.constant 0 : index
    %c0_87 = arith.constant 0 : index
    %237 = vector.load %arg7[%c0_86, %c0_87] : memref<64x8xf32, #tpu.memory_space<vmem>>, vector<64x8xf32>
    %cst_88 = arith.constant dense<0.000000e+00> : vector<8x8xf32>
    %238 = tpu.matmul %236, %237, %cst_88 {dimension_numbers = #tpu.dot_dimension_numbers<[1], [0], [0], [1], [0, 0, 1, 1], [], []>} : vector<8x64xf32>, vector<64x8xf32>, vector<8x8xf32> -> vector<8x8xf32>
    %c0_89 = arith.constant 0 : index
    %c0_90 = arith.constant 0 : index
    %239 = vector.load %arg8[%c0_89, %c0_90] : memref<1x8xf32, #tpu.memory_space<vmem>>, vector<1x8xf32>
    %240 = vector.broadcast %239 : vector<1x8xf32> to vector<8x8xf32>
    %241 = arith.addf %238, %240 : vector<8x8xf32>
    %c0_91 = arith.constant 0 : index
    %c0_92 = arith.constant 0 : index
    %242 = vector.load %arg9[%c0_91, %c0_92] : memref<8x8xf32, #tpu.memory_space<vmem>>, vector<8x8xf32>
    tpu.vector_store %arg9[%c0_91, %c0_92], %241 {strides = array<i32>} : memref<8x8xf32, #tpu.memory_space<vmem>>, vector<8x8xf32>,
    return
  }
}

</mosaic_0001>

<llo_original>
// kernel: garch_lstm_forward.1
$region0: #{garch_lstm_forward.1}
  #allocation0 [shape = 'u32[]', space=smem, size = 0x4, offset = 0x4, fixed_abs, tag = 'smem constant byte address 0x4 - core index']
  #allocation1 [shape = 'u32[144,128]{1,0:T(1,128)}', space=vmem, size = 0x12000, scoped, tag = 'internal scratch']
  #allocation2 [shape = 'f32[9,8,512]{2,1,0:T(8,128)}', space=vmem, size = 0x24000, scoped, tag = 'scratch operand']
  %s0 = inlined_call_operand.vmem [shape: f32[64,10], index: 0, kind: input, shape index: {}]
  %s1 = inlined_call_operand.vmem [shape: f32[10,512], index: 1, kind: input, shape index: {}]
  %s2 = inlined_call_operand.vmem [shape: f32[1,512], index: 2, kind: input, shape index: {}]
  %s3 = inlined_call_operand.hbm [shape: f32[128,512], index: 3, kind: input, shape index: {}]
  %s4 = inlined_call_operand.vmem [shape: f32[1,512], index: 4, kind: input, shape index: {}]
  %s5 = inlined_call_operand.vmem [shape: f32[64,64], index: 5, kind: input, shape index: {}]
  %s6 = inlined_call_operand.vmem [shape: f32[1,64], index: 6, kind: input, shape index: {}]
  %s7 = inlined_call_operand.vmem [shape: f32[64,8], index: 7, kind: input, shape index: {}]
  %s8 = inlined_call_operand.vmem [shape: f32[1,8], index: 8, kind: input, shape index: {}]
  %s9 = inlined_call_operand.vmem [shape: f32[8,8], index: 9, kind: output, shape index: {}]
  %s10 = sld [smem:[#allocation0]]
  $region50: #{garch_lstm_forward.1} parent=0
    _
  %s12 = ssub.s32 1, %s10
  %s13 = scalar_select 0, %s12, %s10
  $region1: #{garch_lstm_forward.1} parent=0
    #allocation3 [shape = 'u8[262144]{0}', space=vmem, size = 0x40000, scoped, tag = 'input window, operand 3, single buffered']
    #allocation4 [shape = 's32[1]{0}', space=sflag, size = 0x4, scoped, tag = 'scoped memory for garch_lstm_forward.1']
    %14 = vsyncpa [#allocation4], 0
    // Predicated region
    $region2: #{garch_lstm_forward.1} parent=1 // pred_check
      _
    $region3: #{garch_lstm_forward.1} parent=1 // pred_check_branch
      %16 = sbr.rel (0) target = $region5
    $region4: #{garch_lstm_forward.1} parent=1 // pred_region
      _
    $region5: #{garch_lstm_forward.1} parent=1 // pred_fallthru
      _
    // Predicated region
    $region6: #{garch_lstm_forward.1} parent=1 // pred_check
      _
    $region7: #{garch_lstm_forward.1} parent=1 // pred_check_branch
      %18 = sbr.rel (0) target = $region9
    $region8: #{garch_lstm_forward.1} parent=1 // pred_region
      _
    $region9: #{garch_lstm_forward.1} parent=1 // pred_fallthru
      _
    // Predicated region
    $region10: #{garch_lstm_forward.1} parent=1 // pred_check
      _
    $region11: #{garch_lstm_forward.1} parent=1 // pred_check_branch
      %20 = sbr.rel (0) target = $region13
    $region12: #{garch_lstm_forward.1} parent=1 // pred_region
      _
    $region13: #{garch_lstm_forward.1} parent=1 // pred_fallthru
      _
    // Predicated region
    $region14: #{garch_lstm_forward.1} parent=1 // pred_check
      _
    $region15: #{garch_lstm_forward.1} parent=1 // pred_check_branch
      %22 = sbr.rel (0) target = $region17
    $region16: #{garch_lstm_forward.1} parent=1 // pred_region
      %s24 = ssub.s32 8192, 8192
      %25 = vsyncadd [#allocation4], %s24
      %s26 = sshll.u32 [#allocation3], 4
      %s27 = int_to_ptr.vmem [resolvable:$true] %s26
      %32 = dma.hbm_to_vmem [thread:$0]  %s3, 8192, %s27, [#allocation4], 512, 512, 32
    $region17: #{garch_lstm_forward.1} parent=1 // pred_fallthru
      _
    // Predicated region
    $region18: #{garch_lstm_forward.1} parent=1 // pred_check
      _
    $region19: #{garch_lstm_forward.1} parent=1 // pred_check_branch
      %34 = sbr.rel (0) target = $region21
    $region20: #{garch_lstm_forward.1} parent=1 // pred_region
      _
    $region21: #{garch_lstm_forward.1} parent=1 // pred_fallthru
      _
    // Predicated region
    $region22: #{garch_lstm_forward.1} parent=1 // pred_check
      _
    $region23: #{garch_lstm_forward.1} parent=1 // pred_check_branch
      %36 = sbr.rel (0) target = $region25
    $region24: #{garch_lstm_forward.1} parent=1 // pred_region
      _
    $region25: #{garch_lstm_forward.1} parent=1 // pred_fallthru
      _
    // Predicated region
    $region26: #{garch_lstm_forward.1} parent=1 // pred_check
      _
    $region27: #{garch_lstm_forward.1} parent=1 // pred_check_branch
      %38 = sbr.rel (0) target = $region29
    $region28: #{garch_lstm_forward.1} parent=1 // pred_region
      _
    $region29: #{garch_lstm_forward.1} parent=1 // pred_fallthru
      _
    // Predicated region
    $region30: #{garch_lstm_forward.1} parent=1 // pred_check
      _
    $region31: #{garch_lstm_forward.1} parent=1 // pred_check_branch
      %40 = sbr.rel (0) target = $region33
    $region32: #{garch_lstm_forward.1} parent=1 // pred_region
      _
    $region33: #{garch_lstm_forward.1} parent=1 // pred_fallthru
      _
    // Predicated region
    $region34: #{garch_lstm_forward.1} parent=1 // pred_check
      _
    $region35: #{garch_lstm_forward.1} parent=1 // pred_check_branch
      %42 = sbr.rel (0) target = $region37
    $region36: #{garch_lstm_forward.1} parent=1 // pred_region
      _
    $region37: #{garch_lstm_forward.1} parent=1 // pred_fallthru
      _
    // Predicated region
    $region38: #{garch_lstm_forward.1} parent=1 // pred_check
      _
    $region39: #{garch_lstm_forward.1} parent=1 // pred_check_branch
      %44 = sbr.rel (0) target = $region41
    $region40: #{garch_lstm_forward.1} parent=1 // pred_region
      %45 = dma.done [#allocation4], 8192
    $region41: #{garch_lstm_forward.1} parent=1 // pred_fallthru
      _
    %v46 = vld [vmem:[%s0] sm:$0xff]
    %v47 = vld [vmem:[%s0 + $0x8] sm:$0xff]
    %v48 = vld [vmem:[%s0 + $0x10] sm:$0xff]
    %v49 = vld [vmem:[%s0 + $0x18] sm:$0xff]
    %v50 = vld [vmem:[%s0 + $0x20] sm:$0xff]
    %v51 = vld [vmem:[%s0 + $0x28] sm:$0xff]
    %v52 = vld [vmem:[%s0 + $0x30] sm:$0xff]
    %v53 = vld [vmem:[%s0 + $0x38] sm:$0xff]
    %v54 = vld [vmem:[%s1] sm:$0xff]
    %v55 = vld [vmem:[%s1 + $0x8] sm:$0xff]
    %v56 = vld [vmem:[%s1 + $0x10] sm:$0xff]
    %v57 = vld [vmem:[%s1 + $0x18] sm:$0xff]
    %v58 = vld [vmem:[%s1 + $0x20] sm:$0x3]
    %v59 = vld [vmem:[%s1 + $0x28] sm:$0x3]
    %v60 = vld [vmem:[%s1 + $0x30] sm:$0x3]
    %v61 = vld [vmem:[%s1 + $0x38] sm:$0x3]
    %v62 = vld [vmem:[%s2] sm:$0xf]
    %v64 = vlaneseq
    %v65 = vshrl.u32 %v64, 7
    %v66 = vsub.s32 0, %v65
    %v67 = vrot.slane %v62, %v66
    %v68 = vlaneseq
    %v69 = vshrl.u32 %v68, 7
    %v70 = vsub.s32 1, %v69
    %v71 = vrot.slane %v62, %v70
    %v72 = vlaneseq
    %v73 = vshrl.u32 %v72, 7
    %v74 = vsub.s32 2, %v73
    %v75 = vrot.slane %v62, %v74
    %v76 = vlaneseq
    %v77 = vshrl.u32 %v76, 7
    %v78 = vsub.s32 3, %v77
    %v79 = vrot.slane %v62, %v78
    %vm84 = vcmask 80896
    %v86 = vsel %vm84, %v46, 0
    %v89 = vsel %vm84, %v47, 0
    %v92 = vsel %vm84, %v48, 0
    %v95 = vsel %vm84, %v49, 0
    %v98 = vsel %vm84, %v50, 0
    %v101 = vsel %vm84, %v51, 0
    %v104 = vsel %vm84, %v52, 0
    %v107 = vsel %vm84, %v53, 0
    %vm109 = vcmask 1041408
    %v111 = vsel %vm109, %v58, 0
    %v114 = vsel %vm109, %v59, 0
    %v117 = vsel %vm109, %v60, 0
    %v120 = vsel %vm109, %v61, 0
    %122 = vmatprep.subr.mxu0 %v55
    %123 = vmatpush1.msra.mxu0 %v54
    %124 = vmatprep.subr.mxu0 %v114
    %125 = vmatpush1.msra.mxu0 %v111
    %126 = vmatprep.subr.mxu0 0.0
    %127 = vmatpush1.msra.mxu0 0.0
    %128 = vmatprep.subr.mxu0 0.0
    %129 = vmatpush1.msra.mxu0 0.0
    %130 = vmatprep.subr.mxu0 0.0
    %131 = vmatpush1.msra.mxu0 0.0
    %132 = vmatprep.subr.mxu0 0.0
    %133 = vmatpush1.msra.mxu0 0.0
    %134 = vmatprep.subr.mxu0 0.0
    %135 = vmatpush1.msra.mxu0 0.0
    %136 = vmatprep.subr.mxu0 0.0
    %137 = vmatpush1.msra.mxu0 0.0
    %138 = vmatprep.subr.mxu0 0.0
    %139 = vmatpush1.msra.mxu0 0.0
    %140 = vmatprep.subr.mxu0 0.0
    %141 = vmatpush1.msra.mxu0 0.0
    %142 = vmatprep.subr.mxu0 0.0
    %143 = vmatpush1.msra.mxu0 0.0
    %144 = vmatprep.subr.mxu0 0.0
    %145 = vmatpush1.msra.mxu0 0.0
    %146 = vmatprep.subr.mxu0 0.0
    %147 = vmatpush1.msra.mxu0 0.0
    %148 = vmatprep.subr.mxu0 0.0
    %149 = vmatpush1.msra.mxu0 0.0
    %150 = vmatprep.subr.mxu0 0.0
    %151 = vmatpush1.msra.mxu0 0.0
    %152 = vmatprep.subr.mxu0 0.0
    %153 = vmatpush1.msra.mxu0 0.0
    %154 = vmatprep.subr.mxu0 0.0
    %155 = vmatpush1.msra.mxu0 0.0
    %156 = vmatprep.subr.mxu0 0.0
    %157 = vmatpush1.msra.mxu0 0.0
    %158 = vmatprep.subr.mxu0 0.0
    %159 = vmatpush1.msra.mxu0 0.0
    %160 = vmatprep.subr.mxu0 0.0
    %161 = vmatpush1.msra.mxu0 0.0
    %162 = vmatprep.subr.mxu0 0.0
    %163 = vmatpush1.msra.mxu0 0.0
    %164 = vmatprep.subr.mxu0 0.0
    %165 = vmatpush1.msra.mxu0 0.0
    %166 = vmatprep.subr.mxu0 0.0
    %167 = vmatpush1.msra.mxu0 0.0
    %168 = vmatprep.subr.mxu0 0.0
    %169 = vmatpush1.msra.mxu0 0.0
    %170 = vmatprep.subr.mxu0 0.0
    %171 = vmatpush1.msra.mxu0 0.0
    %172 = vmatprep.subr.mxu0 0.0
    %173 = vmatpush1.msra.mxu0 0.0
    %174 = vmatprep.subr.mxu0 0.0
    %175 = vmatpush1.msra.mxu0 0.0
    %176 = vmatprep.subr.mxu0 0.0
    %177 = vmatpush1.msra.mxu0 0.0
    %178 = vmatprep.subr.mxu0 0.0
    %179 = vmatpush1.msra.mxu0 0.0
    %180 = vmatprep.subr.mxu0 0.0
    %181 = vmatpush1.msra.mxu0 0.0
    %182 = vmatprep.subr.mxu0 0.0
    %183 = vmatpush1.msra.mxu0 0.0
    %184 = vmatprep.subr.mxu0 0.0
    %185 = vmatpush1.msra.mxu0 0.0
    %186 = vmatprep.mubr.f32.mxu0 0.0
    %187 = vmatmul.mubr.f32.gmra.mrb[0].mxu0 %v86
    %v188 = vpop.f32.mrb[0].mxu0
    %v189 = vadd.f32 %v67, %v188
    %v190 = vpop.f32.mrb[0].mxu0
    %191 = vmatprep.mubr.f32.mxu0 0.0
    %192 = vmatmul.mubr.f32.gmra.mrb[0].mxu0 %v89
    %v193 = vpop.f32.mrb[0].mxu0
    %v194 = vadd.f32 %v67, %v193
    %v195 = vpop.f32.mrb[0].mxu0
    %v196 = vadd.f32 %v71, %v195
    %197 = vmatprep.mubr.f32.mxu0 0.0
    %198 = vmatmul.mubr.f32.gmra.mrb[0].mxu0 %v92
    %v199 = vpop.f32.mrb[0].mxu0
    %v200 = vadd.f32 %v67, %v199
    %v201 = vpop.f32.mrb[0].mxu0
    %v202 = vadd.f32 %v71, %v201
    %203 = vmatprep.mubr.f32.mxu0 0.0
    %204 = vmatmul.mubr.f32.gmra.mrb[0].mxu0 %v95
    %v205 = vpop.f32.mrb[0].mxu0
    %v206 = vadd.f32 %v67, %v205
    %v207 = vpop.f32.mrb[0].mxu0
    %v208 = vadd.f32 %v71, %v207
    %209 = vmatprep.mubr.f32.mxu0 0.0
    %210 = vmatmul.mubr.f32.gmra.mrb[0].mxu0 %v98
    %v211 = vpop.f32.mrb[0].mxu0
    %v212 = vadd.f32 %v67, %v211
    %v213 = vpop.f32.mrb[0].mxu0
    %v214 = vadd.f32 %v71, %v213
    %215 = vmatprep.mubr.f32.mxu0 0.0
    %216 = vmatmul.mubr.f32.gmra.mrb[0].mxu0 %v101
    %v217 = vpop.f32.mrb[0].mxu0
    %v218 = vadd.f32 %v67, %v217
    %v219 = vpop.f32.mrb[0].mxu0
    %v220 = vadd.f32 %v71, %v219
    %221 = vmatprep.mubr.f32.mxu0 0.0
    %222 = vmatmul.mubr.f32.gmra.mrb[0].mxu0 %v104
    %v223 = vpop.f32.mrb[0].mxu0
    %v224 = vadd.f32 %v67, %v223
    %v225 = vpop.f32.mrb[0].mxu0
    %v226 = vadd.f32 %v71, %v225
    %227 = vmatprep.mubr.f32.mxu0 0.0
    %228 = vmatmul.mubr.f32.gmra.mrb[0].mxu0 %v107
    %v229 = vpop.f32.mrb[0].mxu0
    %v230 = vadd.f32 %v67, %v229
    %v231 = vpop.f32.mrb[0].mxu0
    %v232 = vadd.f32 %v71, %v231
    %233 = vdwg.mxu0
    %234 = vmatprep.subr.mxu0 %v57
    %235 = vmatpush1.msra.mxu0 %v56
    %236 = vmatprep.subr.mxu0 %v120
    %237 = vmatpush1.msra.mxu0 %v117
    %238 = vmatprep.subr.mxu0 0.0
    %239 = vmatpush1.msra.mxu0 0.0
    %240 = vmatprep.subr.mxu0 0.0
    %241 = vmatpush1.msra.mxu0 0.0
    %242 = vmatprep.subr.mxu0 0.0
    %243 = vmatpush1.msra.mxu0 0.0
    %244 = vmatprep.subr.mxu0 0.0
    %245 = vmatpush1.msra.mxu0 0.0
    %246 = vmatprep.subr.mxu0 0.0
    %247 = vmatpush1.msra.mxu0 0.0
    %248 = vmatprep.subr.mxu0 0.0
    %249 = vmatpush1.msra.mxu0 0.0
    %250 = vmatprep.subr.mxu0 0.0
    %251 = vmatpush1.msra.mxu0 0.0
    %252 = vmatprep.subr.mxu0 0.0
    %253 = vmatpush1.msra.mxu0 0.0
    %254 = vmatprep.subr.mxu0 0.0
    %255 = vmatpush1.msra.mxu0 0.0
    %256 = vmatprep.subr.mxu0 0.0
    %257 = vmatpush1.msra.mxu0 0.0
    %258 = vmatprep.subr.mxu0 0.0
    %259 = vmatpush1.msra.mxu0 0.0
    %260 = vmatprep.subr.mxu0 0.0
    %261 = vmatpush1.msra.mxu0 0.0
    %262 = vmatprep.subr.mxu0 0.0
    %263 = vmatpush1.msra.mxu0 0.0
    %264 = vmatprep.subr.mxu0 0.0
    %265 = vmatpush1.msra.mxu0 0.0
    %266 = vmatprep.subr.mxu0 0.0
    %267 = vmatpush1.msra.mxu0 0.0
    %268 = vmatprep.subr.mxu0 0.0
    %269 = vmatpush1.msra.mxu0 0.0
    %270 = vmatprep.subr.mxu0 0.0
    %271 = vmatpush1.msra.mxu0 0.0
    %272 = vmatprep.subr.mxu0 0.0
    %273 = vmatpush1.msra.mxu0 0.0
    %274 = vmatprep.subr.mxu0 0.0
    %275 = vmatpush1.msra.mxu0 0.0
    %276 = vmatprep.subr.mxu0 0.0
    %277 = vmatpush1.msra.mxu0 0.0
    %278 = vmatprep.subr.mxu0 0.0
    %279 = vmatpush1.msra.mxu0 0.0
    %280 = vmatprep.subr.mxu0 0.0
    %281 = vmatpush1.msra.mxu0 0.0
    %282 = vmatprep.subr.mxu0 0.0
    %283 = vmatpush1.msra.mxu0 0.0
    %284 = vmatprep.subr.mxu0 0.0
    %285 = vmatpush1.msra.mxu0 0.0
    %286 = vmatprep.subr.mxu0 0.0
    %287 = vmatpush1.msra.mxu0 0.0
    %288 = vmatprep.subr.mxu0 0.0
    %289 = vmatpush1.msra.mxu0 0.0
    %290 = vmatprep.subr.mxu0 0.0
    %291 = vmatpush1.msra.mxu0 0.0
    %292 = vmatprep.subr.mxu0 0.0
    %293 = vmatpush1.msra.mxu0 0.0
    %294 = vmatprep.subr.mxu0 0.0
    %295 = vmatpush1.msra.mxu0 0.0
    %296 = vmatprep.subr.mxu0 0.0
    %297 = vmatpush1.msra.mxu0 0.0
    %298 = vmatprep.mubr.f32.mxu0 0.0
    %299 = vmatmul.mubr.f32.gmra.mrb[0].mxu0 %v86
    %v300 = vpop.f32.mrb[0].mxu0
    %v301 = vadd.f32 %v75, %v300
    %v302 = vpop.f32.mrb[0].mxu0
    %v303 = vadd.f32 %v79, %v302
    %304 = vmatprep.mubr.f32.mxu0 0.0
    %305 = vmatmul.mubr.f32.gmra.mrb[0].mxu0 %v89
    %v306 = vpop.f32.mrb[0].mxu0
    %v307 = vadd.f32 %v75, %v306
    %v308 = vpop.f32.mrb[0].mxu0
    %v309 = vadd.f32 %v79, %v308
    %310 = vmatprep.mubr.f32.mxu0 0.0
    %311 = vmatmul.mubr.f32.gmra.mrb[0].mxu0 %v92
    %v312 = vpop.f32.mrb[0].mxu0
    %v313 = vadd.f32 %v75, %v312
    %v314 = vpop.f32.mrb[0].mxu0
    %v315 = vadd.f32 %v79, %v314
    %316 = vmatprep.mubr.f32.mxu0 0.0
    %317 = vmatmul.mubr.f32.gmra.mrb[0].mxu0 %v95
    %v318 = vpop.f32.mrb[0].mxu0
    %v319 = vadd.f32 %v75, %v318
    %v320 = vpop.f32.mrb[0].mxu0
    %v321 = vadd.f32 %v79, %v320
    %322 = vmatprep.mubr.f32.mxu0 0.0
    %323 = vmatmul.mubr.f32.gmra.mrb[0].mxu0 %v98
    %v324 = vpop.f32.mrb[0].mxu0
    %v325 = vadd.f32 %v75, %v324
    %v326 = vpop.f32.mrb[0].mxu0
    %v327 = vadd.f32 %v79, %v326
    %328 = vmatprep.mubr.f32.mxu0 0.0
    %329 = vmatmul.mubr.f32.gmra.mrb[0].mxu0 %v101
    %v330 = vpop.f32.mrb[0].mxu0
    %v331 = vadd.f32 %v75, %v330
    %v332 = vpop.f32.mrb[0].mxu0
    %v333 = vadd.f32 %v79, %v332
    %334 = vmatprep.mubr.f32.mxu0 0.0
    %335 = vmatmul.mubr.f32.gmra.mrb[0].mxu0 %v104
    %v336 = vpop.f32.mrb[0].mxu0
    %v337 = vadd.f32 %v75, %v336
    %v338 = vpop.f32.mrb[0].mxu0
    %v339 = vadd.f32 %v79, %v338
    %340 = vmatprep.mubr.f32.mxu0 0.0
    %341 = vmatmul.mubr.f32.gmra.mrb[0].mxu0 %v107
    %v342 = vpop.f32.mrb[0].mxu0
    %v343 = vadd.f32 %v75, %v342
    %v344 = vpop.f32.mrb[0].mxu0
    %v345 = vadd.f32 %v79, %v344
    %346 = vdwg.mxu0
    %v347 = vld [vmem:[%s4] sm:$0xf]
    %v349 = vlaneseq
    %v350 = vshrl.u32 %v349, 7
    %v351 = vsub.s32 0, %v350
    %v352 = vrot.slane %v347, %v351
    %v353 = vlaneseq
    %v354 = vshrl.u32 %v353, 7
    %v355 = vsub.s32 1, %v354
    %v356 = vrot.slane %v347, %v355
    %v357 = vlaneseq
    %v358 = vshrl.u32 %v357, 7
    %v359 = vsub.s32 2, %v358
    %v360 = vrot.slane %v347, %v359
    %v361 = vlaneseq
    %v362 = vshrl.u32 %v361, 7
    %v363 = vsub.s32 3, %v362
    %v364 = vrot.slane %v347, %v363
    %v369 = vadd.f32 %v194, %v352
    %v370 = vadd.f32 %v196, %v356
    %v371 = vadd.f32 %v307, %v360
    %v372 = vadd.f32 %v309, %v364
    %s373 = scalar_lea.vmem [#allocation2], 32
    %374 = vst [vmem:[%s373] sm:$0xff] %v369
    %375 = vst [vmem:[%s373 + $0x8] sm:$0xff] %v370
    %376 = vst [vmem:[%s373 + $0x10] sm:$0xff] %v371
    %377 = vst [vmem:[%s373 + $0x18] sm:$0xff] %v372
    %v378 = vadd.f32 %v200, %v352
    %v379 = vadd.f32 %v202, %v356
    %v380 = vadd.f32 %v313, %v360
    %v381 = vadd.f32 %v315, %v364
    %s382 = scalar_lea.vmem [#allocation2], 64
    %383 = vst [vmem:[%s382] sm:$0xff] %v378
    %384 = vst [vmem:[%s382 + $0x8] sm:$0xff] %v379
    %385 = vst [vmem:[%s382 + $0x10] sm:$0xff] %v380
    %386 = vst [vmem:[%s382 + $0x18] sm:$0xff] %v381
    %v387 = vadd.f32 %v206, %v352
    %v388 = vadd.f32 %v208, %v356
    %v389 = vadd.f32 %v319, %v360
    %v390 = vadd.f32 %v321, %v364
    %s391 = scalar_lea.vmem [#allocation2], 96
    %392 = vst [vmem:[%s391] sm:$0xff] %v387
    %393 = vst [vmem:[%s391 + $0x8] sm:$0xff] %v388
    %394 = vst [vmem:[%s391 + $0x10] sm:$0xff] %v389
    %395 = vst [vmem:[%s391 + $0x18] sm:$0xff] %v390
    %v396 = vadd.f32 %v212, %v352
    %v397 = vadd.f32 %v214, %v356
    %v398 = vadd.f32 %v325, %v360
    %v399 = vadd.f32 %v327, %v364
    %s400 = scalar_lea.vmem [#allocation2], 128
    %401 = vst [vmem:[%s400] sm:$0xff] %v396
    %402 = vst [vmem:[%s400 + $0x8] sm:$0xff] %v397
    %403 = vst [vmem:[%s400 + $0x10] sm:$0xff] %v398
    %404 = vst [vmem:[%s400 + $0x18] sm:$0xff] %v399
    %v405 = vadd.f32 %v218, %v352
    %v406 = vadd.f32 %v220, %v356
    %v407 = vadd.f32 %v331, %v360
    %v408 = vadd.f32 %v333, %v364
    %s409 = scalar_lea.vmem [#allocation2], 160
    %410 = vst [vmem:[%s409] sm:$0xff] %v405
    %411 = vst [vmem:[%s409 + $0x8] sm:$0xff] %v406
    %412 = vst [vmem:[%s409 + $0x10] sm:$0xff] %v407
    %413 = vst [vmem:[%s409 + $0x18] sm:$0xff] %v408
    %v414 = vadd.f32 %v224, %v352
    %v415 = vadd.f32 %v226, %v356
    %v416 = vadd.f32 %v337, %v360
    %v417 = vadd.f32 %v339, %v364
    %s418 = scalar_lea.vmem [#allocation2], 192
    %419 = vst [vmem:[%s418] sm:$0xff] %v414
    %420 = vst [vmem:[%s418 + $0x8] sm:$0xff] %v415
    %421 = vst [vmem:[%s418 + $0x10] sm:$0xff] %v416
    %422 = vst [vmem:[%s418 + $0x18] sm:$0xff] %v417
    %v423 = vadd.f32 %v230, %v352
    %v424 = vadd.f32 %v232, %v356
    %v425 = vadd.f32 %v343, %v360
    %v426 = vadd.f32 %v345, %v364
    %s427 = scalar_lea.vmem [#allocation2], 224
    %428 = vst [vmem:[%s427] sm:$0xff] %v423
    %429 = vst [vmem:[%s427 + $0x8] sm:$0xff] %v424
    %430 = vst [vmem:[%s427 + $0x10] sm:$0xff] %v425
    %431 = vst [vmem:[%s427 + $0x18] sm:$0xff] %v426
    %s432 = scalar_lea.vmem [#allocation2], 256
    %433 = vst [vmem:[%s432] sm:$0xff] %v352
    %434 = vst [vmem:[%s432 + $0x8] sm:$0xff] %v356
    %435 = vst [vmem:[%s432 + $0x10] sm:$0xff] %v360
    %436 = vst [vmem:[%s432 + $0x18] sm:$0xff] %v364
    %v437 = vxor.u32 %v189, 2147483648
    %v438 = vxor.u32 %v301, 2147483648
    %v439 = vmul.f32 %v437, 1.442695
    %v440 = vpow.pop %v439
    %v441 = vmul.f32 %v438, 1.442695
    %v442 = vpow.pop %v441
    %v443 = vadd.f32 %v440, 1.0
    %v444 = vadd.f32 %v442, 1.0
    %v445 = vrcp.pop %v443
    %v446 = vmul.f32 1.0, %v445
    %v447 = vrcp.pop %v444
    %v448 = vmul.f32 1.0, %v447
    %v449 = vtanh.pop %v303
    %v450 = vmul.f32 %v446, %v449
    %v451 = vtanh.pop %v450
    %v452 = vmul.f32 %v448, %v451
    %v453 = vld [vmem:[#allocation3] sm:$0xff]
    %v454 = vld [vmem:[#allocation3 + $0x8] sm:$0xff]
    %v455 = vld [vmem:[#allocation3 + $0x10] sm:$0xff]
    %v456 = vld [vmem:[#allocation3 + $0x18] sm:$0xff]
    %v457 = vld [vmem:[#allocation3 + $0x20] sm:$0xff]
    %v458 = vld [vmem:[#allocation3 + $0x28] sm:$0xff]
    %v459 = vld [vmem:[#allocation3 + $0x30] sm:$0xff]
    %v460 = vld [vmem:[#allocation3 + $0x38] sm:$0xff]
    %v461 = vld [vmem:[#allocation3 + $0x40] sm:$0xff]
    %v462 = vld [vmem:[#allocation3 + $0x48] sm:$0xff]
    %v463 = vld [vmem:[#allocation3 + $0x50] sm:$0xff]
    %v464 = vld [vmem:[#allocation3 + $0x58] sm:$0xff]
    %v465 = vld [vmem:[#allocation3 + $0x60] sm:$0xff]
    %v466 = vld [vmem:[#allocation3 + $0x68] sm:$0xff]
    %v467 = vld [vmem:[#allocation3 + $0x70] sm:$0xff]
    %v468 = vld [vmem:[#allocation3 + $0x78] sm:$0xff]
    %v469 = vld [vmem:[#allocation3 + $0x80] sm:$0xff]
    %v470 = vld [vmem:[#allocation3 + $0x88] sm:$0xff]
    %v471 = vld [vmem:[#allocation3 + $0x90] sm:$0xff]
    %v472 = vld [vmem:[#allocation3 + $0x98] sm:$0xff]
    %v473 = vld [vmem:[#allocation3 + $0xa0] sm:$0xff]
    %v474 = vld [vmem:[#allocation3 + $0xa8] sm:$0xff]
    %v475 = vld [vmem:[#allocation3 + $0xb0] sm:$0xff]
    %v476 = vld [vmem:[#allocation3 + $0xb8] sm:$0xff]
    %v477 = vld [vmem:[#allocation3 + $0xc0] sm:$0xff]
    %v478 = vld [vmem:[#allocation3 + $0xc8] sm:$0xff]
    %v479 = vld [vmem:[#allocation3 + $0xd0] sm:$0xff]
    %v480 = vld [vmem:[#allocation3 + $0xd8] sm:$0xff]
    %v481 = vld [vmem:[#allocation3 + $0xe0] sm:$0xff]
    %v482 = vld [vmem:[#allocation3 + $0xe8] sm:$0xff]
    %v483 = vld [vmem:[#allocation3 + $0xf0] sm:$0xff]
    %v484 = vld [vmem:[#allocation3 + $0xf8] sm:$0xff]
    %v485 = vld [vmem:[#allocation3 + $0x100] sm:$0xff]
    %v486 = vld [vmem:[#allocation3 + $0x108] sm:$0xff]
    %v487 = vld [vmem:[#allocation3 + $0x110] sm:$0xff]
    %v488 = vld [vmem:[#allocation3 + $0x118] sm:$0xff]
    %v489 = vld [vmem:[#allocation3 + $0x120] sm:$0xff]
    %v490 = vld [vmem:[#allocation3 + $0x128] sm:$0xff]
    %v491 = vld [vmem:[#allocation3 + $0x130] sm:$0xff]
    %v492 = vld [vmem:[#allocation3 + $0x138] sm:$0xff]
    %v493 = vld [vmem:[#allocation3 + $0x140] sm:$0xff]
    %v494 = vld [vmem:[#allocation3 + $0x148] sm:$0xff]
    %v495 = vld [vmem:[#allocation3 + $0x150] sm:$0xff]
    %v496 = vld [vmem:[#allocation3 + $0x158] sm:$0xff]
    %v497 = vld [vmem:[#allocation3 + $0x160] sm:$0xff]
    %v498 = vld [vmem:[#allocation3 + $0x168] sm:$0xff]
    %v499 = vld [vmem:[#allocation3 + $0x170] sm:$0xff]
    %v500 = vld [vmem:[#allocation3 + $0x178] sm:$0xff]
    %v501 = vld [vmem:[#allocation3 + $0x180] sm:$0xff]
    %v502 = vld [vmem:[#allocation3 + $0x188] sm:$0xff]
    %v503 = vld [vmem:[#allocation3 + $0x190] sm:$0xff]
    %v504 = vld [vmem:[#allocation3 + $0x198] sm:$0xff]
    %v505 = vld [vmem:[#allocation3 + $0x1a0] sm:$0xff]
    %v506 = vld [vmem:[#allocation3 + $0x1a8] sm:$0xff]
    %v507 = vld [vmem:[#allocation3 + $0x1b0] sm:$0xff]
    %v508 = vld [vmem:[#allocation3 + $0x1b8] sm:$0xff]
    %v509 = vld [vmem:[#allocation3 + $0x1c0] sm:$0xff]
    %v510 = vld [vmem:[#allocation3 + $0x1c8] sm:$0xff]
    %v511 = vld [vmem:[#allocation3 + $0x1d0] sm:$0xff]
    %v512 = vld [vmem:[#allocation3 + $0x1d8] sm:$0xff]
    %v513 = vld [vmem:[#allocation3 + $0x1e0] sm:$0xff]
    %v514 = vld [vmem:[#allocation3 + $0x1e8] sm:$0xff]
    %v515 = vld [vmem:[#allocation3 + $0x1f0] sm:$0xff]
    %v516 = vld [vmem:[#allocation3 + $0x1f8] sm:$0xff]
    %v517 = vld [vmem:[%s373] sm:$0xff]
    %v518 = vld [vmem:[%s373 + $0x8] sm:$0xff]
    %v519 = vld [vmem:[%s373 + $0x10] sm:$0xff]
    %v520 = vld [vmem:[%s373 + $0x18] sm:$0xff]
    %521 = vmatprep.subr.mxu0 %v454
    %522 = vmatpush1.msra.mxu0 %v453
    %523 = vmatprep.subr.mxu0 %v458
    %524 = vmatpush1.msra.mxu0 %v457
    %525 = vmatprep.subr.mxu0 %v462
    %526 = vmatpush1.msra.mxu0 %v461
    %527 = vmatprep.subr.mxu0 %v466
    %528 = vmatpush1.msra.mxu0 %v465
    %529 = vmatprep.subr.mxu0 %v470
    %530 = vmatpush1.msra.mxu0 %v469
    %531 = vmatprep.subr.mxu0 %v474
    %532 = vmatpush1.msra.mxu0 %v473
    %533 = vmatprep.subr.mxu0 %v478
    %534 = vmatpush1.msra.mxu0 %v477
    %535 = vmatprep.subr.mxu0 %v482
    %536 = vmatpush1.msra.mxu0 %v481
    %537 = vmatprep.subr.mxu0 %v486
    %538 = vmatpush1.msra.mxu0 %v485
    %539 = vmatprep.subr.mxu0 %v490
    %540 = vmatpush1.msra.mxu0 %v489
    %541 = vmatprep.subr.mxu0 %v494
    %542 = vmatpush1.msra.mxu0 %v493
    %543 = vmatprep.subr.mxu0 %v498
    %544 = vmatpush1.msra.mxu0 %v497
    %545 = vmatprep.subr.mxu0 %v502
    %546 = vmatpush1.msra.mxu0 %v501
    %547 = vmatprep.subr.mxu0 %v506
    %548 = vmatpush1.msra.mxu0 %v505
    %549 = vmatprep.subr.mxu0 %v510
    %550 = vmatpush1.msra.mxu0 %v509
    %551 = vmatprep.subr.mxu0 %v514
    %552 = vmatpush1.msra.mxu0 %v513
    %553 = vmatprep.subr.mxu0 0.0
    %554 = vmatpush1.msra.mxu0 0.0
    %555 = vmatprep.subr.mxu0 0.0
    %556 = vmatpush1.msra.mxu0 0.0
    %557 = vmatprep.subr.mxu0 0.0
    %558 = vmatpush1.msra.mxu0 0.0
    %559 = vmatprep.subr.mxu0 0.0
    %560 = vmatpush1.msra.mxu0 0.0
    %561 = vmatprep.subr.mxu0 0.0
    %562 = vmatpush1.msra.mxu0 0.0
    %563 = vmatprep.subr.mxu0 0.0
    %564 = vmatpush1.msra.mxu0 0.0
    %565 = vmatprep.subr.mxu0 0.0
    %566 = vmatpush1.msra.mxu0 0.0
    %567 = vmatprep.subr.mxu0 0.0
    %568 = vmatpush1.msra.mxu0 0.0
    %569 = vmatprep.subr.mxu0 0.0
    %570 = vmatpush1.msra.mxu0 0.0
    %571 = vmatprep.subr.mxu0 0.0
    %572 = vmatpush1.msra.mxu0 0.0
    %573 = vmatprep.subr.mxu0 0.0
    %574 = vmatpush1.msra.mxu0 0.0
    %575 = vmatprep.subr.mxu0 0.0
    %576 = vmatpush1.msra.mxu0 0.0
    %577 = vmatprep.subr.mxu0 0.0
    %578 = vmatpush1.msra.mxu0 0.0
    %579 = vmatprep.subr.mxu0 0.0
    %580 = vmatpush1.msra.mxu0 0.0
    %581 = vmatprep.subr.mxu0 0.0
    %582 = vmatpush1.msra.mxu0 0.0
    %583 = vmatprep.subr.mxu0 0.0
    %584 = vmatpush1.msra.mxu0 0.0
    %585 = vmatprep.mubr.f32.mxu0 0.0
    %586 = vmatmul.mubr.f32.gmra.mrb[0].mxu0 %v452
    %v587 = vpop.f32.mrb[0].mxu0
    %v588 = vadd.f32 %v517, %v587
    %v589 = vpop.f32.mrb[0].mxu0
    %v590 = vadd.f32 %v518, %v589
    %591 = vdwg.mxu0
    %592 = vmatprep.subr.mxu0 %v456
    %593 = vmatpush1.msra.mxu0 %v455
    %594 = vmatprep.subr.mxu0 %v460
    %595 = vmatpush1.msra.mxu0 %v459
    %596 = vmatprep.subr.mxu0 %v464
    %597 = vmatpush1.msra.mxu0 %v463
    %598 = vmatprep.subr.mxu0 %v468
    %599 = vmatpush1.msra.mxu0 %v467
    %600 = vmatprep.subr.mxu0 %v472
    %601 = vmatpush1.msra.mxu0 %v471
    %602 = vmatprep.subr.mxu0 %v476
    %603 = vmatpush1.msra.mxu0 %v475
    %604 = vmatprep.subr.mxu0 %v480
    %605 = vmatpush1.msra.mxu0 %v479
    %606 = vmatprep.subr.mxu0 %v484
    %607 = vmatpush1.msra.mxu0 %v483
    %608 = vmatprep.subr.mxu0 %v488
    %609 = vmatpush1.msra.mxu0 %v487
    %610 = vmatprep.subr.mxu0 %v492
    %611 = vmatpush1.msra.mxu0 %v491
    %612 = vmatprep.subr.mxu0 %v496
    %613 = vmatpush1.msra.mxu0 %v495
    %614 = vmatprep.subr.mxu0 %v500
    %615 = vmatpush1.msra.mxu0 %v499
    %616 = vmatprep.subr.mxu0 %v504
    %617 = vmatpush1.msra.mxu0 %v503
    %618 = vmatprep.subr.mxu0 %v508
    %619 = vmatpush1.msra.mxu0 %v507
    %620 = vmatprep.subr.mxu0 %v512
    %621 = vmatpush1.msra.mxu0 %v511
    %622 = vmatprep.subr.mxu0 %v516
    %623 = vmatpush1.msra.mxu0 %v515
    %624 = vmatprep.subr.mxu0 0.0
    %625 = vmatpush1.msra.mxu0 0.0
    %626 = vmatprep.subr.mxu0 0.0
    %627 = vmatpush1.msra.mxu0 0.0
    %628 = vmatprep.subr.mxu0 0.0
    %629 = vmatpush1.msra.mxu0 0.0
    %630 = vmatprep.subr.mxu0 0.0
    %631 = vmatpush1.msra.mxu0 0.0
    %632 = vmatprep.subr.mxu0 0.0
    %633 = vmatpush1.msra.mxu0 0.0
    %634 = vmatprep.subr.mxu0 0.0
    %635 = vmatpush1.msra.mxu0 0.0
    %636 = vmatprep.subr.mxu0 0.0
    %637 = vmatpush1.msra.mxu0 0.0
    %638 = vmatprep.subr.mxu0 0.0
    %639 = vmatpush1.msra.mxu0 0.0
    %640 = vmatprep.subr.mxu0 0.0
    %641 = vmatpush1.msra.mxu0 0.0
    %642 = vmatprep.subr.mxu0 0.0
    %643 = vmatpush1.msra.mxu0 0.0
    %644 = vmatprep.subr.mxu0 0.0
    %645 = vmatpush1.msra.mxu0 0.0
    %646 = vmatprep.subr.mxu0 0.0
    %647 = vmatpush1.msra.mxu0 0.0
    %648 = vmatprep.subr.mxu0 0.0
    %649 = vmatpush1.msra.mxu0 0.0
    %650 = vmatprep.subr.mxu0 0.0
    %651 = vmatpush1.msra.mxu0 0.0
    %652 = vmatprep.subr.mxu0 0.0
    %653 = vmatpush1.msra.mxu0 0.0
    %654 = vmatprep.subr.mxu0 0.0
    %655 = vmatpush1.msra.mxu0 0.0
    %656 = vmatprep.mubr.f32.mxu0 0.0
    %657 = vmatmul.mubr.f32.gmra.mrb[0].mxu0 %v452
    %v658 = vpop.f32.mrb[0].mxu0
    %v659 = vadd.f32 %v519, %v658
    %v660 = vpop.f32.mrb[0].mxu0
    %v661 = vadd.f32 %v520, %v660
    %662 = vdwg.mxu0
    %v663 = vxor.u32 %v588, 2147483648
    %v664 = vxor.u32 %v590, 2147483648
    %v665 = vxor.u32 %v659, 2147483648
    %v666 = vmul.f32 %v663, 1.442695
    %v667 = vpow.pop %v666
    %v668 = vmul.f32 %v664, 1.442695
    %v669 = vpow.pop %v668
    %v670 = vmul.f32 %v665, 1.442695
    %v671 = vpow.pop %v670
    %v672 = vadd.f32 %v667, 1.0
    %v673 = vadd.f32 %v669, 1.0
    %v674 = vadd.f32 %v671, 1.0
    %v675 = vrcp.pop %v672
    %v676 = vmul.f32 1.0, %v675
    %v677 = vrcp.pop %v673
    %v678 = vmul.f32 1.0, %v677
    %v679 = vrcp.pop %v674
    %v680 = vmul.f32 1.0, %v679
    %v681 = vtanh.pop %v661
    %v682 = vmul.f32 %v678, %v450
    %v683 = vmul.f32 %v676, %v681
    %v684 = vadd.f32 %v682, %v683
    %v685 = vtanh.pop %v684
    %v686 = vmul.f32 %v680, %v685
    %v687 = vld [vmem:[%s382] sm:$0xff]
    %v688 = vld [vmem:[%s382 + $0x8] sm:$0xff]
    %v689 = vld [vmem:[%s382 + $0x10] sm:$0xff]
    %v690 = vld [vmem:[%s382 + $0x18] sm:$0xff]
    %691 = vmatprep.subr.mxu0 %v454
    %692 = vmatpush1.msra.mxu0 %v453
    %693 = vmatprep.subr.mxu0 %v458
    %694 = vmatpush1.msra.mxu0 %v457
    %695 = vmatprep.subr.mxu0 %v462
    %696 = vmatpush1.msra.mxu0 %v461
    %697 = vmatprep.subr.mxu0 %v466
    %698 = vmatpush1.msra.mxu0 %v465
    %699 = vmatprep.subr.mxu0 %v470
    %700 = vmatpush1.msra.mxu0 %v469
    %701 = vmatprep.subr.mxu0 %v474
    %702 = vmatpush1.msra.mxu0 %v473
    %703 = vmatprep.subr.mxu0 %v478
    %704 = vmatpush1.msra.mxu0 %v477
    %705 = vmatprep.subr.mxu0 %v482
    %706 = vmatpush1.msra.mxu0 %v481
    %707 = vmatprep.subr.mxu0 %v486
    %708 = vmatpush1.msra.mxu0 %v485
    %709 = vmatprep.subr.mxu0 %v490
    %710 = vmatpush1.msra.mxu0 %v489
    %711 = vmatprep.subr.mxu0 %v494
    %712 = vmatpush1.msra.mxu0 %v493
    %713 = vmatprep.subr.mxu0 %v498
    %714 = vmatpush1.msra.mxu0 %v497
    %715 = vmatprep.subr.mxu0 %v502
    %716 = vmatpush1.msra.mxu0 %v501
    %717 = vmatprep.subr.mxu0 %v506
    %718 = vmatpush1.msra.mxu0 %v505
    %719 = vmatprep.subr.mxu0 %v510
    %720 = vmatpush1.msra.mxu0 %v509
    %721 = vmatprep.subr.mxu0 %v514
    %722 = vmatpush1.msra.mxu0 %v513
    %723 = vmatprep.subr.mxu0 0.0
    %724 = vmatpush1.msra.mxu0 0.0
    %725 = vmatprep.subr.mxu0 0.0
    %726 = vmatpush1.msra.mxu0 0.0
    %727 = vmatprep.subr.mxu0 0.0
    %728 = vmatpush1.msra.mxu0 0.0
    %729 = vmatprep.subr.mxu0 0.0
    %730 = vmatpush1.msra.mxu0 0.0
    %731 = vmatprep.subr.mxu0 0.0
    %732 = vmatpush1.msra.mxu0 0.0
    %733 = vmatprep.subr.mxu0 0.0
    %734 = vmatpush1.msra.mxu0 0.0
    %735 = vmatprep.subr.mxu0 0.0
    %736 = vmatpush1.msra.mxu0 0.0
    %737 = vmatprep.subr.mxu0 0.0
    %738 = vmatpush1.msra.mxu0 0.0
    %739 = vmatprep.subr.mxu0 0.0
    %740 = vmatpush1.msra.mxu0 0.0
    %741 = vmatprep.subr.mxu0 0.0
    %742 = vmatpush1.msra.mxu0 0.0
    %743 = vmatprep.subr.mxu0 0.0
    %744 = vmatpush1.msra.mxu0 0.0
    %745 = vmatprep.subr.mxu0 0.0
    %746 = vmatpush1.msra.mxu0 0.0
    %747 = vmatprep.subr.mxu0 0.0
    %748 = vmatpush1.msra.mxu0 0.0
    %749 = vmatprep.subr.mxu0 0.0
    %750 = vmatpush1.msra.mxu0 0.0
    %751 = vmatprep.subr.mxu0 0.0
    %752 = vmatpush1.msra.mxu0 0.0
    %753 = vmatprep.subr.mxu0 0.0
    %754 = vmatpush1.msra.mxu0 0.0
    %755 = vmatprep.mubr.f32.mxu0 0.0
    %756 = vmatmul.mubr.f32.gmra.mrb[0].mxu0 %v686
    %v757 = vpop.f32.mrb[0].mxu0
    %v758 = vadd.f32 %v687, %v757
    %v759 = vpop.f32.mrb[0].mxu0
    %v760 = vadd.f32 %v688, %v759
    %761 = vdwg.mxu0
    %762 = vmatprep.subr.mxu0 %v456
    %763 = vmatpush1.msra.mxu0 %v455
    %764 = vmatprep.subr.mxu0 %v460
    %765 = vmatpush1.msra.mxu0 %v459
    %766 = vmatprep.subr.mxu0 %v464
    %767 = vmatpush1.msra.mxu0 %v463
    %768 = vmatprep.subr.mxu0 %v468
    %769 = vmatpush1.msra.mxu0 %v467
    %770 = vmatprep.subr.mxu0 %v472
    %771 = vmatpush1.msra.mxu0 %v471
    %772 = vmatprep.subr.mxu0 %v476
    %773 = vmatpush1.msra.mxu0 %v475
    %774 = vmatprep.subr.mxu0 %v480
    %775 = vmatpush1.msra.mxu0 %v479
    %776 = vmatprep.subr.mxu0 %v484
    %777 = vmatpush1.msra.mxu0 %v483
    %778 = vmatprep.subr.mxu0 %v488
    %779 = vmatpush1.msra.mxu0 %v487
    %780 = vmatprep.subr.mxu0 %v492
    %781 = vmatpush1.msra.mxu0 %v491
    %782 = vmatprep.subr.mxu0 %v496
    %783 = vmatpush1.msra.mxu0 %v495
    %784 = vmatprep.subr.mxu0 %v500
    %785 = vmatpush1.msra.mxu0 %v499
    %786 = vmatprep.subr.mxu0 %v504
    %787 = vmatpush1.msra.mxu0 %v503
    %788 = vmatprep.subr.mxu0 %v508
    %789 = vmatpush1.msra.mxu0 %v507
    %790 = vmatprep.subr.mxu0 %v512
    %791 = vmatpush1.msra.mxu0 %v511
    %792 = vmatprep.subr.mxu0 %v516
    %793 = vmatpush1.msra.mxu0 %v515
    %794 = vmatprep.subr.mxu0 0.0
    %795 = vmatpush1.msra.mxu0 0.0
    %796 = vmatprep.subr.mxu0 0.0
    %797 = vmatpush1.msra.mxu0 0.0
    %798 = vmatprep.subr.mxu0 0.0
    %799 = vmatpush1.msra.mxu0 0.0
    %800 = vmatprep.subr.mxu0 0.0
    %801 = vmatpush1.msra.mxu0 0.0
    %802 = vmatprep.subr.mxu0 0.0
    %803 = vmatpush1.msra.mxu0 0.0
    %804 = vmatprep.subr.mxu0 0.0
    %805 = vmatpush1.msra.mxu0 0.0
    %806 = vmatprep.subr.mxu0 0.0
    %807 = vmatpush1.msra.mxu0 0.0
    %808 = vmatprep.subr.mxu0 0.0
    %809 = vmatpush1.msra.mxu0 0.0
    %810 = vmatprep.subr.mxu0 0.0
    %811 = vmatpush1.msra.mxu0 0.0
    %812 = vmatprep.subr.mxu0 0.0
    %813 = vmatpush1.msra.mxu0 0.0
    %814 = vmatprep.subr.mxu0 0.0
    %815 = vmatpush1.msra.mxu0 0.0
    %816 = vmatprep.subr.mxu0 0.0
    %817 = vmatpush1.msra.mxu0 0.0
    %818 = vmatprep.subr.mxu0 0.0
    %819 = vmatpush1.msra.mxu0 0.0
    %820 = vmatprep.subr.mxu0 0.0
    %821 = vmatpush1.msra.mxu0 0.0
    %822 = vmatprep.subr.mxu0 0.0
    %823 = vmatpush1.msra.mxu0 0.0
    %824 = vmatprep.subr.mxu0 0.0
    %825 = vmatpush1.msra.mxu0 0.0
    %826 = vmatprep.mubr.f32.mxu0 0.0
    %827 = vmatmul.mubr.f32.gmra.mrb[0].mxu0 %v686
    %v828 = vpop.f32.mrb[0].mxu0
    %v829 = vadd.f32 %v689, %v828
    %v830 = vpop.f32.mrb[0].mxu0
    %v831 = vadd.f32 %v690, %v830
    %832 = vdwg.mxu0
    %v833 = vxor.u32 %v758, 2147483648
    %v834 = vxor.u32 %v760, 2147483648
    %v835 = vxor.u32 %v829, 2147483648
    %v836 = vmul.f32 %v833, 1.442695
    %v837 = vpow.pop %v836
    %v838 = vmul.f32 %v834, 1.442695
    %v839 = vpow.pop %v838
    %v840 = vmul.f32 %v835, 1.442695
    %v841 = vpow.pop %v840
    %v842 = vadd.f32 %v837, 1.0
    %v843 = vadd.f32 %v839, 1.0
    %v844 = vadd.f32 %v841, 1.0
    %v845 = vrcp.pop %v842
    %v846 = vmul.f32 1.0, %v845
    %v847 = vrcp.pop %v843
    %v848 = vmul.f32 1.0, %v847
    %v849 = vrcp.pop %v844
    %v850 = vmul.f32 1.0, %v849
    %v851 = vtanh.pop %v831
    %v852 = vmul.f32 %v848, %v684
    %v853 = vmul.f32 %v846, %v851
    %v854 = vadd.f32 %v852, %v853
    %v855 = vtanh.pop %v854
    %v856 = vmul.f32 %v850, %v855
    %v857 = vld [vmem:[%s391] sm:$0xff]
    %v858 = vld [vmem:[%s391 + $0x8] sm:$0xff]
    %v859 = vld [vmem:[%s391 + $0x10] sm:$0xff]
    %v860 = vld [vmem:[%s391 + $0x18] sm:$0xff]
    %861 = vmatprep.subr.mxu0 %v454
    %862 = vmatpush1.msra.mxu0 %v453
    %863 = vmatprep.subr.mxu0 %v458
    %864 = vmatpush1.msra.mxu0 %v457
    %865 = vmatprep.subr.mxu0 %v462
    %866 = vmatpush1.msra.mxu0 %v461
    %867 = vmatprep.subr.mxu0 %v466
    %868 = vmatpush1.msra.mxu0 %v465
    %869 = vmatprep.subr.mxu0 %v470
    %870 = vmatpush1.msra.mxu0 %v469
    %871 = vmatprep.subr.mxu0 %v474
    %872 = vmatpush1.msra.mxu0 %v473
    %873 = vmatprep.subr.mxu0 %v478
    %874 = vmatpush1.msra.mxu0 %v477
    %875 = vmatprep.subr.mxu0 %v482
    %876 = vmatpush1.msra.mxu0 %v481
    %877 = vmatprep.subr.mxu0 %v486
    %878 = vmatpush1.msra.mxu0 %v485
    %879 = vmatprep.subr.mxu0 %v490
    %880 = vmatpush1.msra.mxu0 %v489
    %881 = vmatprep.subr.mxu0 %v494
    %882 = vmatpush1.msra.mxu0 %v493
    %883 = vmatprep.subr.mxu0 %v498
    %884 = vmatpush1.msra.mxu0 %v497
    %885 = vmatprep.subr.mxu0 %v502
    %886 = vmatpush1.msra.mxu0 %v501
    %887 = vmatprep.subr.mxu0 %v506
    %888 = vmatpush1.msra.mxu0 %v505
    %889 = vmatprep.subr.mxu0 %v510
    %890 = vmatpush1.msra.mxu0 %v509
    %891 = vmatprep.subr.mxu0 %v514
    %892 = vmatpush1.msra.mxu0 %v513
    %893 = vmatprep.subr.mxu0 0.0
    %894 = vmatpush1.msra.mxu0 0.0
    %895 = vmatprep.subr.mxu0 0.0
    %896 = vmatpush1.msra.mxu0 0.0
    %897 = vmatprep.subr.mxu0 0.0
    %898 = vmatpush1.msra.mxu0 0.0
    %899 = vmatprep.subr.mxu0 0.0
    %900 = vmatpush1.msra.mxu0 0.0
    %901 = vmatprep.subr.mxu0 0.0
    %902 = vmatpush1.msra.mxu0 0.0
    %903 = vmatprep.subr.mxu0 0.0
    %904 = vmatpush1.msra.mxu0 0.0
    %905 = vmatprep.subr.mxu0 0.0
    %906 = vmatpush1.msra.mxu0 0.0
    %907 = vmatprep.subr.mxu0 0.0
    %908 = vmatpush1.msra.mxu0 0.0
    %909 = vmatprep.subr.mxu0 0.0
    %910 = vmatpush1.msra.mxu0 0.0
    %911 = vmatprep.subr.mxu0 0.0
    %912 = vmatpush1.msra.mxu0 0.0
    %913 = vmatprep.subr.mxu0 0.0
    %914 = vmatpush1.msra.mxu0 0.0
    %915 = vmatprep.subr.mxu0 0.0
    %916 = vmatpush1.msra.mxu0 0.0
    %917 = vmatprep.subr.mxu0 0.0
    %918 = vmatpush1.msra.mxu0 0.0
    %919 = vmatprep.subr.mxu0 0.0
    %920 = vmatpush1.msra.mxu0 0.0
    %921 = vmatprep.subr.mxu0 0.0
    %922 = vmatpush1.msra.mxu0 0.0
    %923 = vmatprep.subr.mxu0 0.0
    %924 = vmatpush1.msra.mxu0 0.0
    %925 = vmatprep.mubr.f32.mxu0 0.0
    %926 = vmatmul.mubr.f32.gmra.mrb[0].mxu0 %v856
    %v927 = vpop.f32.mrb[0].mxu0
    %v928 = vadd.f32 %v857, %v927
    %v929 = vpop.f32.mrb[0].mxu0
    %v930 = vadd.f32 %v858, %v929
    %931 = vdwg.mxu0
    %932 = vmatprep.subr.mxu0 %v456
    %933 = vmatpush1.msra.mxu0 %v455
    %934 = vmatprep.subr.mxu0 %v460
    %935 = vmatpush1.msra.mxu0 %v459
    %936 = vmatprep.subr.mxu0 %v464
    %937 = vmatpush1.msra.mxu0 %v463
    %938 = vmatprep.subr.mxu0 %v468
    %939 = vmatpush1.msra.mxu0 %v467
    %940 = vmatprep.subr.mxu0 %v472
    %941 = vmatpush1.msra.mxu0 %v471
    %942 = vmatprep.subr.mxu0 %v476
    %943 = vmatpush1.msra.mxu0 %v475
    %944 = vmatprep.subr.mxu0 %v480
    %945 = vmatpush1.msra.mxu0 %v479
    %946 = vmatprep.subr.mxu0 %v484
    %947 = vmatpush1.msra.mxu0 %v483
    %948 = vmatprep.subr.mxu0 %v488
    %949 = vmatpush1.msra.mxu0 %v487
    %950 = vmatprep.subr.mxu0 %v492
    %951 = vmatpush1.msra.mxu0 %v491
    %952 = vmatprep.subr.mxu0 %v496
    %953 = vmatpush1.msra.mxu0 %v495
    %954 = vmatprep.subr.mxu0 %v500
    %955 = vmatpush1.msra.mxu0 %v499
    %956 = vmatprep.subr.mxu0 %v504
    %957 = vmatpush1.msra.mxu0 %v503
    %958 = vmatprep.subr.mxu0 %v508
    %959 = vmatpush1.msra.mxu0 %v507
    %960 = vmatprep.subr.mxu0 %v512
    %961 = vmatpush1.msra.mxu0 %v511
    %962 = vmatprep.subr.mxu0 %v516
    %963 = vmatpush1.msra.mxu0 %v515
    %964 = vmatprep.subr.mxu0 0.0
    %965 = vmatpush1.msra.mxu0 0.0
    %966 = vmatprep.subr.mxu0 0.0
    %967 = vmatpush1.msra.mxu0 0.0
    %968 = vmatprep.subr.mxu0 0.0
    %969 = vmatpush1.msra.mxu0 0.0
    %970 = vmatprep.subr.mxu0 0.0
    %971 = vmatpush1.msra.mxu0 0.0
    %972 = vmatprep.subr.mxu0 0.0
    %973 = vmatpush1.msra.mxu0 0.0
    %974 = vmatprep.subr.mxu0 0.0
    %975 = vmatpush1.msra.mxu0 0.0
    %976 = vmatprep.subr.mxu0 0.0
    %977 = vmatpush1.msra.mxu0 0.0
    %978 = vmatprep.subr.mxu0 0.0
    %979 = vmatpush1.msra.mxu0 0.0
    %980 = vmatprep.subr.mxu0 0.0
    %981 = vmatpush1.msra.mxu0 0.0
    %982 = vmatprep.subr.mxu0 0.0
    %983 = vmatpush1.msra.mxu0 0.0
    %984 = vmatprep.subr.mxu0 0.0
    %985 = vmatpush1.msra.mxu0 0.0
    %986 = vmatprep.subr.mxu0 0.0
    %987 = vmatpush1.msra.mxu0 0.0
    %988 = vmatprep.subr.mxu0 0.0
    %989 = vmatpush1.msra.mxu0 0.0
    %990 = vmatprep.subr.mxu0 0.0
    %991 = vmatpush1.msra.mxu0 0.0
    %992 = vmatprep.subr.mxu0 0.0
    %993 = vmatpush1.msra.mxu0 0.0
    %994 = vmatprep.subr.mxu0 0.0
    %995 = vmatpush1.msra.mxu0 0.0
    %996 = vmatprep.mubr.f32.mxu0 0.0
    %997 = vmatmul.mubr.f32.gmra.mrb[0].mxu0 %v856
    %v998 = vpop.f32.mrb[0].mxu0
    %v999 = vadd.f32 %v859, %v998
    %v1000 = vpop.f32.mrb[0].mxu0
    %v1001 = vadd.f32 %v860, %v1000
    %1002 = vdwg.mxu0
    %v1003 = vxor.u32 %v928, 2147483648
    %v1004 = vxor.u32 %v930, 2147483648
    %v1005 = vxor.u32 %v999, 2147483648
    %v1006 = vmul.f32 %v1003, 1.442695
    %v1007 = vpow.pop %v1006
    %v1008 = vmul.f32 %v1004, 1.442695
    %v1009 = vpow.pop %v1008
    %v1010 = vmul.f32 %v1005, 1.442695
    %v1011 = vpow.pop %v1010
    %v1012 = vadd.f32 %v1007, 1.0
    %v1013 = vadd.f32 %v1009, 1.0
    %v1014 = vadd.f32 %v1011, 1.0
    %v1015 = vrcp.pop %v1012
    %v1016 = vmul.f32 1.0, %v1015
    %v1017 = vrcp.pop %v1013
    %v1018 = vmul.f32 1.0, %v1017
    %v1019 = vrcp.pop %v1014
    %v1020 = vmul.f32 1.0, %v1019
    %v1021 = vtanh.pop %v1001
    %v1022 = vmul.f32 %v1018, %v854
    %v1023 = vmul.f32 %v1016, %v1021
    %v1024 = vadd.f32 %v1022, %v1023
    %v1025 = vtanh.pop %v1024
    %v1026 = vmul.f32 %v1020, %v1025
    %v1027 = vld [vmem:[%s400] sm:$0xff]
    %v1028 = vld [vmem:[%s400 + $0x8] sm:$0xff]
    %v1029 = vld [vmem:[%s400 + $0x10] sm:$0xff]
    %v1030 = vld [vmem:[%s400 + $0x18] sm:$0xff]
    %1031 = vmatprep.subr.mxu0 %v454
    %1032 = vmatpush1.msra.mxu0 %v453
    %1033 = vmatprep.subr.mxu0 %v458
    %1034 = vmatpush1.msra.mxu0 %v457
    %1035 = vmatprep.subr.mxu0 %v462
    %1036 = vmatpush1.msra.mxu0 %v461
    %1037 = vmatprep.subr.mxu0 %v466
    %1038 = vmatpush1.msra.mxu0 %v465
    %1039 = vmatprep.subr.mxu0 %v470
    %1040 = vmatpush1.msra.mxu0 %v469
    %1041 = vmatprep.subr.mxu0 %v474
    %1042 = vmatpush1.msra.mxu0 %v473
    %1043 = vmatprep.subr.mxu0 %v478
    %1044 = vmatpush1.msra.mxu0 %v477
    %1045 = vmatprep.subr.mxu0 %v482
    %1046 = vmatpush1.msra.mxu0 %v481
    %1047 = vmatprep.subr.mxu0 %v486
    %1048 = vmatpush1.msra.mxu0 %v485
    %1049 = vmatprep.subr.mxu0 %v490
    %1050 = vmatpush1.msra.mxu0 %v489
    %1051 = vmatprep.subr.mxu0 %v494
    %1052 = vmatpush1.msra.mxu0 %v493
    %1053 = vmatprep.subr.mxu0 %v498
    %1054 = vmatpush1.msra.mxu0 %v497
    %1055 = vmatprep.subr.mxu0 %v502
    %1056 = vmatpush1.msra.mxu0 %v501
    %1057 = vmatprep.subr.mxu0 %v506
    %1058 = vmatpush1.msra.mxu0 %v505
    %1059 = vmatprep.subr.mxu0 %v510
    %1060 = vmatpush1.msra.mxu0 %v509
    %1061 = vmatprep.subr.mxu0 %v514
    %1062 = vmatpush1.msra.mxu0 %v513
    %1063 = vmatprep.subr.mxu0 0.0
    %1064 = vmatpush1.msra.mxu0 0.0
    %1065 = vmatprep.subr.mxu0 0.0
    %1066 = vmatpush1.msra.mxu0 0.0
    %1067 = vmatprep.subr.mxu0 0.0
    %1068 = vmatpush1.msra.mxu0 0.0
    %1069 = vmatprep.subr.mxu0 0.0
    %1070 = vmatpush1.msra.mxu0 0.0
    %1071 = vmatprep.subr.mxu0 0.0
    %1072 = vmatpush1.msra.mxu0 0.0
    %1073 = vmatprep.subr.mxu0 0.0
    %1074 = vmatpush1.msra.mxu0 0.0
    %1075 = vmatprep.subr.mxu0 0.0
    %1076 = vmatpush1.msra.mxu0 0.0
    %1077 = vmatprep.subr.mxu0 0.0
    %1078 = vmatpush1.msra.mxu0 0.0
    %1079 = vmatprep.subr.mxu0 0.0
    %1080 = vmatpush1.msra.mxu0 0.0
    %1081 = vmatprep.subr.mxu0 0.0
    %1082 = vmatpush1.msra.mxu0 0.0
    %1083 = vmatprep.subr.mxu0 0.0
    %1084 = vmatpush1.msra.mxu0 0.0
    %1085 = vmatprep.subr.mxu0 0.0
    %1086 = vmatpush1.msra.mxu0 0.0
    %1087 = vmatprep.subr.mxu0 0.0
    %1088 = vmatpush1.msra.mxu0 0.0
    %1089 = vmatprep.subr.mxu0 0.0
    %1090 = vmatpush1.msra.mxu0 0.0
    %1091 = vmatprep.subr.mxu0 0.0
    %1092 = vmatpush1.msra.mxu0 0.0
    %1093 = vmatprep.subr.mxu0 0.0
    %1094 = vmatpush1.msra.mxu0 0.0
    %1095 = vmatprep.mubr.f32.mxu0 0.0
    %1096 = vmatmul.mubr.f32.gmra.mrb[0].mxu0 %v1026
    %v1097 = vpop.f32.mrb[0].mxu0
    %v1098 = vadd.f32 %v1027, %v1097
    %v1099 = vpop.f32.mrb[0].mxu0
    %v1100 = vadd.f32 %v1028, %v1099
    %1101 = vdwg.mxu0
    %1102 = vmatprep.subr.mxu0 %v456
    %1103 = vmatpush1.msra.mxu0 %v455
    %1104 = vmatprep.subr.mxu0 %v460
    %1105 = vmatpush1.msra.mxu0 %v459
    %1106 = vmatprep.subr.mxu0 %v464
    %1107 = vmatpush1.msra.mxu0 %v463
    %1108 = vmatprep.subr.mxu0 %v468
    %1109 = vmatpush1.msra.mxu0 %v467
    %1110 = vmatprep.subr.mxu0 %v472
    %1111 = vmatpush1.msra.mxu0 %v471
    %1112 = vmatprep.subr.mxu0 %v476
    %1113 = vmatpush1.msra.mxu0 %v475
    %1114 = vmatprep.subr.mxu0 %v480
    %1115 = vmatpush1.msra.mxu0 %v479
    %1116 = vmatprep.subr.mxu0 %v484
    %1117 = vmatpush1.msra.mxu0 %v483
    %1118 = vmatprep.subr.mxu0 %v488
    %1119 = vmatpush1.msra.mxu0 %v487
    %1120 = vmatprep.subr.mxu0 %v492
    %1121 = vmatpush1.msra.mxu0 %v491
    %1122 = vmatprep.subr.mxu0 %v496
    %1123 = vmatpush1.msra.mxu0 %v495
    %1124 = vmatprep.subr.mxu0 %v500
    %1125 = vmatpush1.msra.mxu0 %v499
    %1126 = vmatprep.subr.mxu0 %v504
    %1127 = vmatpush1.msra.mxu0 %v503
    %1128 = vmatprep.subr.mxu0 %v508
    %1129 = vmatpush1.msra.mxu0 %v507
    %1130 = vmatprep.subr.mxu0 %v512
    %1131 = vmatpush1.msra.mxu0 %v511
    %1132 = vmatprep.subr.mxu0 %v516
    %1133 = vmatpush1.msra.mxu0 %v515
    %1134 = vmatprep.subr.mxu0 0.0
    %1135 = vmatpush1.msra.mxu0 0.0
    %1136 = vmatprep.subr.mxu0 0.0
    %1137 = vmatpush1.msra.mxu0 0.0
    %1138 = vmatprep.subr.mxu0 0.0
    %1139 = vmatpush1.msra.mxu0 0.0
    %1140 = vmatprep.subr.mxu0 0.0
    %1141 = vmatpush1.msra.mxu0 0.0
    %1142 = vmatprep.subr.mxu0 0.0
    %1143 = vmatpush1.msra.mxu0 0.0
    %1144 = vmatprep.subr.mxu0 0.0
    %1145 = vmatpush1.msra.mxu0 0.0
    %1146 = vmatprep.subr.mxu0 0.0
    %1147 = vmatpush1.msra.mxu0 0.0
    %1148 = vmatprep.subr.mxu0 0.0
    %1149 = vmatpush1.msra.mxu0 0.0
    %1150 = vmatprep.subr.mxu0 0.0
    %1151 = vmatpush1.msra.mxu0 0.0
    %1152 = vmatprep.subr.mxu0 0.0
    %1153 = vmatpush1.msra.mxu0 0.0
    %1154 = vmatprep.subr.mxu0 0.0
    %1155 = vmatpush1.msra.mxu0 0.0
    %1156 = vmatprep.subr.mxu0 0.0
    %1157 = vmatpush1.msra.mxu0 0.0
    %1158 = vmatprep.subr.mxu0 0.0
    %1159 = vmatpush1.msra.mxu0 0.0
    %1160 = vmatprep.subr.mxu0 0.0
    %1161 = vmatpush1.msra.mxu0 0.0
    %1162 = vmatprep.subr.mxu0 0.0
    %1163 = vmatpush1.msra.mxu0 0.0
    %1164 = vmatprep.subr.mxu0 0.0
    %1165 = vmatpush1.msra.mxu0 0.0
    %1166 = vmatprep.mubr.f32.mxu0 0.0
    %1167 = vmatmul.mubr.f32.gmra.mrb[0].mxu0 %v1026
    %v1168 = vpop.f32.mrb[0].mxu0
    %v1169 = vadd.f32 %v1029, %v1168
    %v1170 = vpop.f32.mrb[0].mxu0
    %v1171 = vadd.f32 %v1030, %v1170
    %1172 = vdwg.mxu0
    %v1173 = vxor.u32 %v1098, 2147483648
    %v1174 = vxor.u32 %v1100, 2147483648
    %v1175 = vxor.u32 %v1169, 2147483648
    %v1176 = vmul.f32 %v1173, 1.442695
    %v1177 = vpow.pop %v1176
    %v1178 = vmul.f32 %v1174, 1.442695
    %v1179 = vpow.pop %v1178
    %v1180 = vmul.f32 %v1175, 1.442695
    %v1181 = vpow.pop %v1180
    %v1182 = vadd.f32 %v1177, 1.0
    %v1183 = vadd.f32 %v1179, 1.0
    %v1184 = vadd.f32 %v1181, 1.0
    %v1185 = vrcp.pop %v1182
    %v1186 = vmul.f32 1.0, %v1185
    %v1187 = vrcp.pop %v1183
    %v1188 = vmul.f32 1.0, %v1187
    %v1189 = vrcp.pop %v1184
    %v1190 = vmul.f32 1.0, %v1189
    %v1191 = vtanh.pop %v1171
    %v1192 = vmul.f32 %v1188, %v1024
    %v1193 = vmul.f32 %v1186, %v1191
    %v1194 = vadd.f32 %v1192, %v1193
    %v1195 = vtanh.pop %v1194
    %v1196 = vmul.f32 %v1190, %v1195
    %v1197 = vld [vmem:[%s409] sm:$0xff]
    %v1198 = vld [vmem:[%s409 + $0x8] sm:$0xff]
    %v1199 = vld [vmem:[%s409 + $0x10] sm:$0xff]
    %v1200 = vld [vmem:[%s409 + $0x18] sm:$0xff]
    %1201 = vmatprep.subr.mxu0 %v454
    %1202 = vmatpush1.msra.mxu0 %v453
    %1203 = vmatprep.subr.mxu0 %v458
    %1204 = vmatpush1.msra.mxu0 %v457
    %1205 = vmatprep.subr.mxu0 %v462
    %1206 = vmatpush1.msra.mxu0 %v461
    %1207 = vmatprep.subr.mxu0 %v466
    %1208 = vmatpush1.msra.mxu0 %v465
    %1209 = vmatprep.subr.mxu0 %v470
    %1210 = vmatpush1.msra.mxu0 %v469
    %1211 = vmatprep.subr.mxu0 %v474
    %1212 = vmatpush1.msra.mxu0 %v473
    %1213 = vmatprep.subr.mxu0 %v478
    %1214 = vmatpush1.msra.mxu0 %v477
    %1215 = vmatprep.subr.mxu0 %v482
    %1216 = vmatpush1.msra.mxu0 %v481
    %1217 = vmatprep.subr.mxu0 %v486
    %1218 = vmatpush1.msra.mxu0 %v485
    %1219 = vmatprep.subr.mxu0 %v490
    %1220 = vmatpush1.msra.mxu0 %v489
    %1221 = vmatprep.subr.mxu0 %v494
    %1222 = vmatpush1.msra.mxu0 %v493
    %1223 = vmatprep.subr.mxu0 %v498
    %1224 = vmatpush1.msra.mxu0 %v497
    %1225 = vmatprep.subr.mxu0 %v502
    %1226 = vmatpush1.msra.mxu0 %v501
    %1227 = vmatprep.subr.mxu0 %v506
    %1228 = vmatpush1.msra.mxu0 %v505
    %1229 = vmatprep.subr.mxu0 %v510
    %1230 = vmatpush1.msra.mxu0 %v509
    %1231 = vmatprep.subr.mxu0 %v514
    %1232 = vmatpush1.msra.mxu0 %v513
    %1233 = vmatprep.subr.mxu0 0.0
    %1234 = vmatpush1.msra.mxu0 0.0
    %1235 = vmatprep.subr.mxu0 0.0
    %1236 = vmatpush1.msra.mxu0 0.0
    %1237 = vmatprep.subr.mxu0 0.0
    %1238 = vmatpush1.msra.mxu0 0.0
    %1239 = vmatprep.subr.mxu0 0.0
    %1240 = vmatpush1.msra.mxu0 0.0
    %1241 = vmatprep.subr.mxu0 0.0
    %1242 = vmatpush1.msra.mxu0 0.0
    %1243 = vmatprep.subr.mxu0 0.0
    %1244 = vmatpush1.msra.mxu0 0.0
    %1245 = vmatprep.subr.mxu0 0.0
    %1246 = vmatpush1.msra.mxu0 0.0
    %1247 = vmatprep.subr.mxu0 0.0
    %1248 = vmatpush1.msra.mxu0 0.0
    %1249 = vmatprep.subr.mxu0 0.0
    %1250 = vmatpush1.msra.mxu0 0.0
    %1251 = vmatprep.subr.mxu0 0.0
    %1252 = vmatpush1.msra.mxu0 0.0
    %1253 = vmatprep.subr.mxu0 0.0
    %1254 = vmatpush1.msra.mxu0 0.0
    %1255 = vmatprep.subr.mxu0 0.0
    %1256 = vmatpush1.msra.mxu0 0.0
    %1257 = vmatprep.subr.mxu0 0.0
    %1258 = vmatpush1.msra.mxu0 0.0
    %1259 = vmatprep.subr.mxu0 0.0
    %1260 = vmatpush1.msra.mxu0 0.0
    %1261 = vmatprep.subr.mxu0 0.0
    %1262 = vmatpush1.msra.mxu0 0.0
    %1263 = vmatprep.subr.mxu0 0.0
    %1264 = vmatpush1.msra.mxu0 0.0
    %1265 = vmatprep.mubr.f32.mxu0 0.0
    %1266 = vmatmul.mubr.f32.gmra.mrb[0].mxu0 %v1196
    %v1267 = vpop.f32.mrb[0].mxu0
    %v1268 = vadd.f32 %v1197, %v1267
    %v1269 = vpop.f32.mrb[0].mxu0
    %v1270 = vadd.f32 %v1198, %v1269
    %1271 = vdwg.mxu0
    %1272 = vmatprep.subr.mxu0 %v456
    %1273 = vmatpush1.msra.mxu0 %v455
    %1274 = vmatprep.subr.mxu0 %v460
    %1275 = vmatpush1.msra.mxu0 %v459
    %1276 = vmatprep.subr.mxu0 %v464
    %1277 = vmatpush1.msra.mxu0 %v463
    %1278 = vmatprep.subr.mxu0 %v468
    %1279 = vmatpush1.msra.mxu0 %v467
    %1280 = vmatprep.subr.mxu0 %v472
    %1281 = vmatpush1.msra.mxu0 %v471
    %1282 = vmatprep.subr.mxu0 %v476
    %1283 = vmatpush1.msra.mxu0 %v475
    %1284 = vmatprep.subr.mxu0 %v480
    %1285 = vmatpush1.msra.mxu0 %v479
    %1286 = vmatprep.subr.mxu0 %v484
    %1287 = vmatpush1.msra.mxu0 %v483
    %1288 = vmatprep.subr.mxu0 %v488
    %1289 = vmatpush1.msra.mxu0 %v487
    %1290 = vmatprep.subr.mxu0 %v492
    %1291 = vmatpush1.msra.mxu0 %v491
    %1292 = vmatprep.subr.mxu0 %v496
    %1293 = vmatpush1.msra.mxu0 %v495
    %1294 = vmatprep.subr.mxu0 %v500
    %1295 = vmatpush1.msra.mxu0 %v499
    %1296 = vmatprep.subr.mxu0 %v504
    %1297 = vmatpush1.msra.mxu0 %v503
    %1298 = vmatprep.subr.mxu0 %v508
    %1299 = vmatpush1.msra.mxu0 %v507
    %1300 = vmatprep.subr.mxu0 %v512
    %1301 = vmatpush1.msra.mxu0 %v511
    %1302 = vmatprep.subr.mxu0 %v516
    %1303 = vmatpush1.msra.mxu0 %v515
    %1304 = vmatprep.subr.mxu0 0.0
    %1305 = vmatpush1.msra.mxu0 0.0
    %1306 = vmatprep.subr.mxu0 0.0
    %1307 = vmatpush1.msra.mxu0 0.0
    %1308 = vmatprep.subr.mxu0 0.0
    %1309 = vmatpush1.msra.mxu0 0.0
    %1310 = vmatprep.subr.mxu0 0.0
    %1311 = vmatpush1.msra.mxu0 0.0
    %1312 = vmatprep.subr.mxu0 0.0
    %1313 = vmatpush1.msra.mxu0 0.0
    %1314 = vmatprep.subr.mxu0 0.0
    %1315 = vmatpush1.msra.mxu0 0.0
    %1316 = vmatprep.subr.mxu0 0.0
    %1317 = vmatpush1.msra.mxu0 0.0
    %1318 = vmatprep.subr.mxu0 0.0
    %1319 = vmatpush1.msra.mxu0 0.0
    %1320 = vmatprep.subr.mxu0 0.0
    %1321 = vmatpush1.msra.mxu0 0.0
    %1322 = vmatprep.subr.mxu0 0.0
    %1323 = vmatpush1.msra.mxu0 0.0
    %1324 = vmatprep.subr.mxu0 0.0
    %1325 = vmatpush1.msra.mxu0 0.0
    %1326 = vmatprep.subr.mxu0 0.0
    %1327 = vmatpush1.msra.mxu0 0.0
    %1328 = vmatprep.subr.mxu0 0.0
    %1329 = vmatpush1.msra.mxu0 0.0
    %1330 = vmatprep.subr.mxu0 0.0
    %1331 = vmatpush1.msra.mxu0 0.0
    %1332 = vmatprep.subr.mxu0 0.0
    %1333 = vmatpush1.msra.mxu0 0.0
    %1334 = vmatprep.subr.mxu0 0.0
    %1335 = vmatpush1.msra.mxu0 0.0
    %1336 = vmatprep.mubr.f32.mxu0 0.0
    %1337 = vmatmul.mubr.f32.gmra.mrb[0].mxu0 %v1196
    %v1338 = vpop.f32.mrb[0].mxu0
    %v1339 = vadd.f32 %v1199, %v1338
    %v1340 = vpop.f32.mrb[0].mxu0
    %v1341 = vadd.f32 %v1200, %v1340
    %1342 = vdwg.mxu0
    %v1343 = vxor.u32 %v1268, 2147483648
    %v1344 = vxor.u32 %v1270, 2147483648
    %v1345 = vxor.u32 %v1339, 2147483648
    %v1346 = vmul.f32 %v1343, 1.442695
    %v1347 = vpow.pop %v1346
    %v1348 = vmul.f32 %v1344, 1.442695
    %v1349 = vpow.pop %v1348
    %v1350 = vmul.f32 %v1345, 1.442695
    %v1351 = vpow.pop %v1350
    %v1352 = vadd.f32 %v1347, 1.0
    %v1353 = vadd.f32 %v1349, 1.0
    %v1354 = vadd.f32 %v1351, 1.0
    %v1355 = vrcp.pop %v1352
    %v1356 = vmul.f32 1.0, %v1355
    %v1357 = vrcp.pop %v1353
    %v1358 = vmul.f32 1.0, %v1357
    %v1359 = vrcp.pop %v1354
    %v1360 = vmul.f32 1.0, %v1359
    %v1361 = vtanh.pop %v1341
    %v1362 = vmul.f32 %v1358, %v1194
    %v1363 = vmul.f32 %v1356, %v1361
    %v1364 = vadd.f32 %v1362, %v1363
    %v1365 = vtanh.pop %v1364
    %v1366 = vmul.f32 %v1360, %v1365
    %v1367 = vld [vmem:[%s418] sm:$0xff]
    %v1368 = vld [vmem:[%s418 + $0x8] sm:$0xff]
    %v1369 = vld [vmem:[%s418 + $0x10] sm:$0xff]
    %v1370 = vld [vmem:[%s418 + $0x18] sm:$0xff]
    %1371 = vmatprep.subr.mxu0 %v454
    %1372 = vmatpush1.msra.mxu0 %v453
    %1373 = vmatprep.subr.mxu0 %v458
    %1374 = vmatpush1.msra.mxu0 %v457
    %1375 = vmatprep.subr.mxu0 %v462
    %1376 = vmatpush1.msra.mxu0 %v461
    %1377 = vmatprep.subr.mxu0 %v466
    %1378 = vmatpush1.msra.mxu0 %v465
    %1379 = vmatprep.subr.mxu0 %v470
    %1380 = vmatpush1.msra.mxu0 %v469
    %1381 = vmatprep.subr.mxu0 %v474
    %1382 = vmatpush1.msra.mxu0 %v473
    %1383 = vmatprep.subr.mxu0 %v478
    %1384 = vmatpush1.msra.mxu0 %v477
    %1385 = vmatprep.subr.mxu0 %v482
    %1386 = vmatpush1.msra.mxu0 %v481
    %1387 = vmatprep.subr.mxu0 %v486
    %1388 = vmatpush1.msra.mxu0 %v485
    %1389 = vmatprep.subr.mxu0 %v490
    %1390 = vmatpush1.msra.mxu0 %v489
    %1391 = vmatprep.subr.mxu0 %v494
    %1392 = vmatpush1.msra.mxu0 %v493
    %1393 = vmatprep.subr.mxu0 %v498
    %1394 = vmatpush1.msra.mxu0 %v497
    %1395 = vmatprep.subr.mxu0 %v502
    %1396 = vmatpush1.msra.mxu0 %v501
    %1397 = vmatprep.subr.mxu0 %v506
    %1398 = vmatpush1.msra.mxu0 %v505
    %1399 = vmatprep.subr.mxu0 %v510
    %1400 = vmatpush1.msra.mxu0 %v509
    %1401 = vmatprep.subr.mxu0 %v514
    %1402 = vmatpush1.msra.mxu0 %v513
    %1403 = vmatprep.subr.mxu0 0.0
    %1404 = vmatpush1.msra.mxu0 0.0
    %1405 = vmatprep.subr.mxu0 0.0
    %1406 = vmatpush1.msra.mxu0 0.0
    %1407 = vmatprep.subr.mxu0 0.0
    %1408 = vmatpush1.msra.mxu0 0.0
    %1409 = vmatprep.subr.mxu0 0.0
    %1410 = vmatpush1.msra.mxu0 0.0
    %1411 = vmatprep.subr.mxu0 0.0
    %1412 = vmatpush1.msra.mxu0 0.0
    %1413 = vmatprep.subr.mxu0 0.0
    %1414 = vmatpush1.msra.mxu0 0.0
    %1415 = vmatprep.subr.mxu0 0.0
    %1416 = vmatpush1.msra.mxu0 0.0
    %1417 = vmatprep.subr.mxu0 0.0
    %1418 = vmatpush1.msra.mxu0 0.0
    %1419 = vmatprep.subr.mxu0 0.0
    %1420 = vmatpush1.msra.mxu0 0.0
    %1421 = vmatprep.subr.mxu0 0.0
    %1422 = vmatpush1.msra.mxu0 0.0
    %1423 = vmatprep.subr.mxu0 0.0
    %1424 = vmatpush1.msra.mxu0 0.0
    %1425 = vmatprep.subr.mxu0 0.0
    %1426 = vmatpush1.msra.mxu0 0.0
    %1427 = vmatprep.subr.mxu0 0.0
    %1428 = vmatpush1.msra.mxu0 0.0
    %1429 = vmatprep.subr.mxu0 0.0
    %1430 = vmatpush1.msra.mxu0 0.0
    %1431 = vmatprep.subr.mxu0 0.0
    %1432 = vmatpush1.msra.mxu0 0.0
    %1433 = vmatprep.subr.mxu0 0.0
    %1434 = vmatpush1.msra.mxu0 0.0
    %1435 = vmatprep.mubr.f32.mxu0 0.0
    %1436 = vmatmul.mubr.f32.gmra.mrb[0].mxu0 %v1366
    %v1437 = vpop.f32.mrb[0].mxu0
    %v1438 = vadd.f32 %v1367, %v1437
    %v1439 = vpop.f32.mrb[0].mxu0
    %v1440 = vadd.f32 %v1368, %v1439
    %1441 = vdwg.mxu0
    %1442 = vmatprep.subr.mxu0 %v456
    %1443 = vmatpush1.msra.mxu0 %v455
    %1444 = vmatprep.subr.mxu0 %v460
    %1445 = vmatpush1.msra.mxu0 %v459
    %1446 = vmatprep.subr.mxu0 %v464
    %1447 = vmatpush1.msra.mxu0 %v463
    %1448 = vmatprep.subr.mxu0 %v468
    %1449 = vmatpush1.msra.mxu0 %v467
    %1450 = vmatprep.subr.mxu0 %v472
    %1451 = vmatpush1.msra.mxu0 %v471
    %1452 = vmatprep.subr.mxu0 %v476
    %1453 = vmatpush1.msra.mxu0 %v475
    %1454 = vmatprep.subr.mxu0 %v480
    %1455 = vmatpush1.msra.mxu0 %v479
    %1456 = vmatprep.subr.mxu0 %v484
    %1457 = vmatpush1.msra.mxu0 %v483
    %1458 = vmatprep.subr.mxu0 %v488
    %1459 = vmatpush1.msra.mxu0 %v487
    %1460 = vmatprep.subr.mxu0 %v492
    %1461 = vmatpush1.msra.mxu0 %v491
    %1462 = vmatprep.subr.mxu0 %v496
    %1463 = vmatpush1.msra.mxu0 %v495
    %1464 = vmatprep.subr.mxu0 %v500
    %1465 = vmatpush1.msra.mxu0 %v499
    %1466 = vmatprep.subr.mxu0 %v504
    %1467 = vmatpush1.msra.mxu0 %v503
    %1468 = vmatprep.subr.mxu0 %v508
    %1469 = vmatpush1.msra.mxu0 %v507
    %1470 = vmatprep.subr.mxu0 %v512
    %1471 = vmatpush1.msra.mxu0 %v511
    %1472 = vmatprep.subr.mxu0 %v516
    %1473 = vmatpush1.msra.mxu0 %v515
    %1474 = vmatprep.subr.mxu0 0.0
    %1475 = vmatpush1.msra.mxu0 0.0
    %1476 = vmatprep.subr.mxu0 0.0
    %1477 = vmatpush1.msra.mxu0 0.0
    %1478 = vmatprep.subr.mxu0 0.0
    %1479 = vmatpush1.msra.mxu0 0.0
    %1480 = vmatprep.subr.mxu0 0.0
    %1481 = vmatpush1.msra.mxu0 0.0
    %1482 = vmatprep.subr.mxu0 0.0
    %1483 = vmatpush1.msra.mxu0 0.0
    %1484 = vmatprep.subr.mxu0 0.0
    %1485 = vmatpush1.msra.mxu0 0.0
    %1486 = vmatprep.subr.mxu0 0.0
    %1487 = vmatpush1.msra.mxu0 0.0
    %1488 = vmatprep.subr.mxu0 0.0
    %1489 = vmatpush1.msra.mxu0 0.0
    %1490 = vmatprep.subr.mxu0 0.0
    %1491 = vmatpush1.msra.mxu0 0.0
    %1492 = vmatprep.subr.mxu0 0.0
    %1493 = vmatpush1.msra.mxu0 0.0
    %1494 = vmatprep.subr.mxu0 0.0
    %1495 = vmatpush1.msra.mxu0 0.0
    %1496 = vmatprep.subr.mxu0 0.0
    %1497 = vmatpush1.msra.mxu0 0.0
    %1498 = vmatprep.subr.mxu0 0.0
    %1499 = vmatpush1.msra.mxu0 0.0
    %1500 = vmatprep.subr.mxu0 0.0
    %1501 = vmatpush1.msra.mxu0 0.0
    %1502 = vmatprep.subr.mxu0 0.0
    %1503 = vmatpush1.msra.mxu0 0.0
    %1504 = vmatprep.subr.mxu0 0.0
    %1505 = vmatpush1.msra.mxu0 0.0
    %1506 = vmatprep.mubr.f32.mxu0 0.0
    %1507 = vmatmul.mubr.f32.gmra.mrb[0].mxu0 %v1366
    %v1508 = vpop.f32.mrb[0].mxu0
    %v1509 = vadd.f32 %v1369, %v1508
    %v1510 = vpop.f32.mrb[0].mxu0
    %v1511 = vadd.f32 %v1370, %v1510
    %1512 = vdwg.mxu0
    %v1513 = vxor.u32 %v1438, 2147483648
    %v1514 = vxor.u32 %v1440, 2147483648
    %v1515 = vxor.u32 %v1509, 2147483648
    %v1516 = vmul.f32 %v1513, 1.442695
    %v1517 = vpow.pop %v1516
    %v1518 = vmul.f32 %v1514, 1.442695
    %v1519 = vpow.pop %v1518
    %v1520 = vmul.f32 %v1515, 1.442695
    %v1521 = vpow.pop %v1520
    %v1522 = vadd.f32 %v1517, 1.0
    %v1523 = vadd.f32 %v1519, 1.0
    %v1524 = vadd.f32 %v1521, 1.0
    %v1525 = vrcp.pop %v1522
    %v1526 = vmul.f32 1.0, %v1525
    %v1527 = vrcp.pop %v1523
    %v1528 = vmul.f32 1.0, %v1527
    %v1529 = vrcp.pop %v1524
    %v1530 = vmul.f32 1.0, %v1529
    %v1531 = vtanh.pop %v1511
    %v1532 = vmul.f32 %v1528, %v1364
    %v1533 = vmul.f32 %v1526, %v1531
    %v1534 = vadd.f32 %v1532, %v1533
    %v1535 = vtanh.pop %v1534
    %v1536 = vmul.f32 %v1530, %v1535
    %v1537 = vld [vmem:[%s427] sm:$0xff]
    %v1538 = vld [vmem:[%s427 + $0x8] sm:$0xff]
    %v1539 = vld [vmem:[%s427 + $0x10] sm:$0xff]
    %v1540 = vld [vmem:[%s427 + $0x18] sm:$0xff]
    %1541 = vmatprep.subr.mxu0 %v454
    %1542 = vmatpush1.msra.mxu0 %v453
    %1543 = vmatprep.subr.mxu0 %v458
    %1544 = vmatpush1.msra.mxu0 %v457
    %1545 = vmatprep.subr.mxu0 %v462
    %1546 = vmatpush1.msra.mxu0 %v461
    %1547 = vmatprep.subr.mxu0 %v466
    %1548 = vmatpush1.msra.mxu0 %v465
    %1549 = vmatprep.subr.mxu0 %v470
    %1550 = vmatpush1.msra.mxu0 %v469
    %1551 = vmatprep.subr.mxu0 %v474
    %1552 = vmatpush1.msra.mxu0 %v473
    %1553 = vmatprep.subr.mxu0 %v478
    %1554 = vmatpush1.msra.mxu0 %v477
    %1555 = vmatprep.subr.mxu0 %v482
    %1556 = vmatpush1.msra.mxu0 %v481
    %1557 = vmatprep.subr.mxu0 %v486
    %1558 = vmatpush1.msra.mxu0 %v485
    %1559 = vmatprep.subr.mxu0 %v490
    %1560 = vmatpush1.msra.mxu0 %v489
    %1561 = vmatprep.subr.mxu0 %v494
    %1562 = vmatpush1.msra.mxu0 %v493
    %1563 = vmatprep.subr.mxu0 %v498
    %1564 = vmatpush1.msra.mxu0 %v497
    %1565 = vmatprep.subr.mxu0 %v502
    %1566 = vmatpush1.msra.mxu0 %v501
    %1567 = vmatprep.subr.mxu0 %v506
    %1568 = vmatpush1.msra.mxu0 %v505
    %1569 = vmatprep.subr.mxu0 %v510
    %1570 = vmatpush1.msra.mxu0 %v509
    %1571 = vmatprep.subr.mxu0 %v514
    %1572 = vmatpush1.msra.mxu0 %v513
    %1573 = vmatprep.subr.mxu0 0.0
    %1574 = vmatpush1.msra.mxu0 0.0
    %1575 = vmatprep.subr.mxu0 0.0
    %1576 = vmatpush1.msra.mxu0 0.0
    %1577 = vmatprep.subr.mxu0 0.0
    %1578 = vmatpush1.msra.mxu0 0.0
    %1579 = vmatprep.subr.mxu0 0.0
    %1580 = vmatpush1.msra.mxu0 0.0
    %1581 = vmatprep.subr.mxu0 0.0
    %1582 = vmatpush1.msra.mxu0 0.0
    %1583 = vmatprep.subr.mxu0 0.0
    %1584 = vmatpush1.msra.mxu0 0.0
    %1585 = vmatprep.subr.mxu0 0.0
    %1586 = vmatpush1.msra.mxu0 0.0
    %1587 = vmatprep.subr.mxu0 0.0
    %1588 = vmatpush1.msra.mxu0 0.0
    %1589 = vmatprep.subr.mxu0 0.0
    %1590 = vmatpush1.msra.mxu0 0.0
    %1591 = vmatprep.subr.mxu0 0.0
    %1592 = vmatpush1.msra.mxu0 0.0
    %1593 = vmatprep.subr.mxu0 0.0
    %1594 = vmatpush1.msra.mxu0 0.0
    %1595 = vmatprep.subr.mxu0 0.0
    %1596 = vmatpush1.msra.mxu0 0.0
    %1597 = vmatprep.subr.mxu0 0.0
    %1598 = vmatpush1.msra.mxu0 0.0
    %1599 = vmatprep.subr.mxu0 0.0
    %1600 = vmatpush1.msra.mxu0 0.0
    %1601 = vmatprep.subr.mxu0 0.0
    %1602 = vmatpush1.msra.mxu0 0.0
    %1603 = vmatprep.subr.mxu0 0.0
    %1604 = vmatpush1.msra.mxu0 0.0
    %1605 = vmatprep.mubr.f32.mxu0 0.0
    %1606 = vmatmul.mubr.f32.gmra.mrb[0].mxu0 %v1536
    %v1607 = vpop.f32.mrb[0].mxu0
    %v1608 = vadd.f32 %v1537, %v1607
    %v1609 = vpop.f32.mrb[0].mxu0
    %v1610 = vadd.f32 %v1538, %v1609
    %1611 = vdwg.mxu0
    %1612 = vmatprep.subr.mxu0 %v456
    %1613 = vmatpush1.msra.mxu0 %v455
    %1614 = vmatprep.subr.mxu0 %v460
    %1615 = vmatpush1.msra.mxu0 %v459
    %1616 = vmatprep.subr.mxu0 %v464
    %1617 = vmatpush1.msra.mxu0 %v463
    %1618 = vmatprep.subr.mxu0 %v468
    %1619 = vmatpush1.msra.mxu0 %v467
    %1620 = vmatprep.subr.mxu0 %v472
    %1621 = vmatpush1.msra.mxu0 %v471
    %1622 = vmatprep.subr.mxu0 %v476
    %1623 = vmatpush1.msra.mxu0 %v475
    %1624 = vmatprep.subr.mxu0 %v480
    %1625 = vmatpush1.msra.mxu0 %v479
    %1626 = vmatprep.subr.mxu0 %v484
    %1627 = vmatpush1.msra.mxu0 %v483
    %1628 = vmatprep.subr.mxu0 %v488
    %1629 = vmatpush1.msra.mxu0 %v487
    %1630 = vmatprep.subr.mxu0 %v492
    %1631 = vmatpush1.msra.mxu0 %v491
    %1632 = vmatprep.subr.mxu0 %v496
    %1633 = vmatpush1.msra.mxu0 %v495
    %1634 = vmatprep.subr.mxu0 %v500
    %1635 = vmatpush1.msra.mxu0 %v499
    %1636 = vmatprep.subr.mxu0 %v504
    %1637 = vmatpush1.msra.mxu0 %v503
    %1638 = vmatprep.subr.mxu0 %v508
    %1639 = vmatpush1.msra.mxu0 %v507
    %1640 = vmatprep.subr.mxu0 %v512
    %1641 = vmatpush1.msra.mxu0 %v511
    %1642 = vmatprep.subr.mxu0 %v516
    %1643 = vmatpush1.msra.mxu0 %v515
    %1644 = vmatprep.subr.mxu0 0.0
    %1645 = vmatpush1.msra.mxu0 0.0
    %1646 = vmatprep.subr.mxu0 0.0
    %1647 = vmatpush1.msra.mxu0 0.0
    %1648 = vmatprep.subr.mxu0 0.0
    %1649 = vmatpush1.msra.mxu0 0.0
    %1650 = vmatprep.subr.mxu0 0.0
    %1651 = vmatpush1.msra.mxu0 0.0
    %1652 = vmatprep.subr.mxu0 0.0
    %1653 = vmatpush1.msra.mxu0 0.0
    %1654 = vmatprep.subr.mxu0 0.0
    %1655 = vmatpush1.msra.mxu0 0.0
    %1656 = vmatprep.subr.mxu0 0.0
    %1657 = vmatpush1.msra.mxu0 0.0
    %1658 = vmatprep.subr.mxu0 0.0
    %1659 = vmatpush1.msra.mxu0 0.0
    %1660 = vmatprep.subr.mxu0 0.0
    %1661 = vmatpush1.msra.mxu0 0.0
    %1662 = vmatprep.subr.mxu0 0.0
    %1663 = vmatpush1.msra.mxu0 0.0
    %1664 = vmatprep.subr.mxu0 0.0
    %1665 = vmatpush1.msra.mxu0 0.0
    %1666 = vmatprep.subr.mxu0 0.0
    %1667 = vmatpush1.msra.mxu0 0.0
    %1668 = vmatprep.subr.mxu0 0.0
    %1669 = vmatpush1.msra.mxu0 0.0
    %1670 = vmatprep.subr.mxu0 0.0
    %1671 = vmatpush1.msra.mxu0 0.0
    %1672 = vmatprep.subr.mxu0 0.0
    %1673 = vmatpush1.msra.mxu0 0.0
    %1674 = vmatprep.subr.mxu0 0.0
    %1675 = vmatpush1.msra.mxu0 0.0
    %1676 = vmatprep.mubr.f32.mxu0 0.0
    %1677 = vmatmul.mubr.f32.gmra.mrb[0].mxu0 %v1536
    %v1678 = vpop.f32.mrb[0].mxu0
    %v1679 = vadd.f32 %v1539, %v1678
    %v1680 = vpop.f32.mrb[0].mxu0
    %v1681 = vadd.f32 %v1540, %v1680
    %1682 = vdwg.mxu0
    %v1683 = vxor.u32 %v1608, 2147483648
    %v1684 = vxor.u32 %v1610, 2147483648
    %v1685 = vxor.u32 %v1679, 2147483648
    %v1686 = vmul.f32 %v1683, 1.442695
    %v1687 = vpow.pop %v1686
    %v1688 = vmul.f32 %v1684, 1.442695
    %v1689 = vpow.pop %v1688
    %v1690 = vmul.f32 %v1685, 1.442695
    %v1691 = vpow.pop %v1690
    %v1692 = vadd.f32 %v1687, 1.0
    %v1693 = vadd.f32 %v1689, 1.0
    %v1694 = vadd.f32 %v1691, 1.0
    %v1695 = vrcp.pop %v1692
    %v1696 = vmul.f32 1.0, %v1695
    %v1697 = vrcp.pop %v1693
    %v1698 = vmul.f32 1.0, %v1697
    %v1699 = vrcp.pop %v1694
    %v1700 = vmul.f32 1.0, %v1699
    %v1701 = vtanh.pop %v1681
    %v1702 = vmul.f32 %v1698, %v1534
    %v1703 = vmul.f32 %v1696, %v1701
    %v1704 = vadd.f32 %v1702, %v1703
    %v1705 = vtanh.pop %v1704
    %v1706 = vmul.f32 %v1700, %v1705
    %v1707 = vld [vmem:[%s432] sm:$0xff]
    %v1708 = vld [vmem:[%s432 + $0x8] sm:$0xff]
    %v1709 = vld [vmem:[%s432 + $0x10] sm:$0xff]
    %v1710 = vld [vmem:[%s432 + $0x18] sm:$0xff]
    %1711 = vmatprep.subr.mxu0 %v454
    %1712 = vmatpush1.msra.mxu0 %v453
    %1713 = vmatprep.subr.mxu0 %v458
    %1714 = vmatpush1.msra.mxu0 %v457
    %1715 = vmatprep.subr.mxu0 %v462
    %1716 = vmatpush1.msra.mxu0 %v461
    %1717 = vmatprep.subr.mxu0 %v466
    %1718 = vmatpush1.msra.mxu0 %v465
    %1719 = vmatprep.subr.mxu0 %v470
    %1720 = vmatpush1.msra.mxu0 %v469
    %1721 = vmatprep.subr.mxu0 %v474
    %1722 = vmatpush1.msra.mxu0 %v473
    %1723 = vmatprep.subr.mxu0 %v478
    %1724 = vmatpush1.msra.mxu0 %v477
    %1725 = vmatprep.subr.mxu0 %v482
    %1726 = vmatpush1.msra.mxu0 %v481
    %1727 = vmatprep.subr.mxu0 %v486
    %1728 = vmatpush1.msra.mxu0 %v485
    %1729 = vmatprep.subr.mxu0 %v490
    %1730 = vmatpush1.msra.mxu0 %v489
    %1731 = vmatprep.subr.mxu0 %v494
    %1732 = vmatpush1.msra.mxu0 %v493
    %1733 = vmatprep.subr.mxu0 %v498
    %1734 = vmatpush1.msra.mxu0 %v497
    %1735 = vmatprep.subr.mxu0 %v502
    %1736 = vmatpush1.msra.mxu0 %v501
    %1737 = vmatprep.subr.mxu0 %v506
    %1738 = vmatpush1.msra.mxu0 %v505
    %1739 = vmatprep.subr.mxu0 %v510
    %1740 = vmatpush1.msra.mxu0 %v509
    %1741 = vmatprep.subr.mxu0 %v514
    %1742 = vmatpush1.msra.mxu0 %v513
    %1743 = vmatprep.subr.mxu0 0.0
    %1744 = vmatpush1.msra.mxu0 0.0
    %1745 = vmatprep.subr.mxu0 0.0
    %1746 = vmatpush1.msra.mxu0 0.0
    %1747 = vmatprep.subr.mxu0 0.0
    %1748 = vmatpush1.msra.mxu0 0.0
    %1749 = vmatprep.subr.mxu0 0.0
    %1750 = vmatpush1.msra.mxu0 0.0
    %1751 = vmatprep.subr.mxu0 0.0
    %1752 = vmatpush1.msra.mxu0 0.0
    %1753 = vmatprep.subr.mxu0 0.0
    %1754 = vmatpush1.msra.mxu0 0.0
    %1755 = vmatprep.subr.mxu0 0.0
    %1756 = vmatpush1.msra.mxu0 0.0
    %1757 = vmatprep.subr.mxu0 0.0
    %1758 = vmatpush1.msra.mxu0 0.0
    %1759 = vmatprep.subr.mxu0 0.0
    %1760 = vmatpush1.msra.mxu0 0.0
    %1761 = vmatprep.subr.mxu0 0.0
    %1762 = vmatpush1.msra.mxu0 0.0
    %1763 = vmatprep.subr.mxu0 0.0
    %1764 = vmatpush1.msra.mxu0 0.0
    %1765 = vmatprep.subr.mxu0 0.0
    %1766 = vmatpush1.msra.mxu0 0.0
    %1767 = vmatprep.subr.mxu0 0.0
    %1768 = vmatpush1.msra.mxu0 0.0
    %1769 = vmatprep.subr.mxu0 0.0
    %1770 = vmatpush1.msra.mxu0 0.0
    %1771 = vmatprep.subr.mxu0 0.0
    %1772 = vmatpush1.msra.mxu0 0.0
    %1773 = vmatprep.subr.mxu0 0.0
    %1774 = vmatpush1.msra.mxu0 0.0
    %1775 = vmatprep.mubr.f32.mxu0 0.0
    %1776 = vmatmul.mubr.f32.gmra.mrb[0].mxu0 %v1706
    %v1777 = vpop.f32.mrb[0].mxu0
    %v1778 = vadd.f32 %v1707, %v1777
    %v1779 = vpop.f32.mrb[0].mxu0
    %v1780 = vadd.f32 %v1708, %v1779
    %1781 = vdwg.mxu0
    %1782 = vmatprep.subr.mxu0 %v456
    %1783 = vmatpush1.msra.mxu0 %v455
    %1784 = vmatprep.subr.mxu0 %v460
    %1785 = vmatpush1.msra.mxu0 %v459
    %1786 = vmatprep.subr.mxu0 %v464
    %1787 = vmatpush1.msra.mxu0 %v463
    %1788 = vmatprep.subr.mxu0 %v468
    %1789 = vmatpush1.msra.mxu0 %v467
    %1790 = vmatprep.subr.mxu0 %v472
    %1791 = vmatpush1.msra.mxu0 %v471
    %1792 = vmatprep.subr.mxu0 %v476
    %1793 = vmatpush1.msra.mxu0 %v475
    %1794 = vmatprep.subr.mxu0 %v480
    %1795 = vmatpush1.msra.mxu0 %v479
    %1796 = vmatprep.subr.mxu0 %v484
    %1797 = vmatpush1.msra.mxu0 %v483
    %1798 = vmatprep.subr.mxu0 %v488
    %1799 = vmatpush1.msra.mxu0 %v487
    %1800 = vmatprep.subr.mxu0 %v492
    %1801 = vmatpush1.msra.mxu0 %v491
    %1802 = vmatprep.subr.mxu0 %v496
    %1803 = vmatpush1.msra.mxu0 %v495
    %1804 = vmatprep.subr.mxu0 %v500
    %1805 = vmatpush1.msra.mxu0 %v499
    %1806 = vmatprep.subr.mxu0 %v504
    %1807 = vmatpush1.msra.mxu0 %v503
    %1808 = vmatprep.subr.mxu0 %v508
    %1809 = vmatpush1.msra.mxu0 %v507
    %1810 = vmatprep.subr.mxu0 %v512
    %1811 = vmatpush1.msra.mxu0 %v511
    %1812 = vmatprep.subr.mxu0 %v516
    %1813 = vmatpush1.msra.mxu0 %v515
    %1814 = vmatprep.subr.mxu0 0.0
    %1815 = vmatpush1.msra.mxu0 0.0
    %1816 = vmatprep.subr.mxu0 0.0
    %1817 = vmatpush1.msra.mxu0 0.0
    %1818 = vmatprep.subr.mxu0 0.0
    %1819 = vmatpush1.msra.mxu0 0.0
    %1820 = vmatprep.subr.mxu0 0.0
    %1821 = vmatpush1.msra.mxu0 0.0
    %1822 = vmatprep.subr.mxu0 0.0
    %1823 = vmatpush1.msra.mxu0 0.0
    %1824 = vmatprep.subr.mxu0 0.0
    %1825 = vmatpush1.msra.mxu0 0.0
    %1826 = vmatprep.subr.mxu0 0.0
    %1827 = vmatpush1.msra.mxu0 0.0
    %1828 = vmatprep.subr.mxu0 0.0
    %1829 = vmatpush1.msra.mxu0 0.0
    %1830 = vmatprep.subr.mxu0 0.0
    %1831 = vmatpush1.msra.mxu0 0.0
    %1832 = vmatprep.subr.mxu0 0.0
    %1833 = vmatpush1.msra.mxu0 0.0
    %1834 = vmatprep.subr.mxu0 0.0
    %1835 = vmatpush1.msra.mxu0 0.0
    %1836 = vmatprep.subr.mxu0 0.0
    %1837 = vmatpush1.msra.mxu0 0.0
    %1838 = vmatprep.subr.mxu0 0.0
    %1839 = vmatpush1.msra.mxu0 0.0
    %1840 = vmatprep.subr.mxu0 0.0
    %1841 = vmatpush1.msra.mxu0 0.0
    %1842 = vmatprep.subr.mxu0 0.0
    %1843 = vmatpush1.msra.mxu0 0.0
    %1844 = vmatprep.subr.mxu0 0.0
    %1845 = vmatpush1.msra.mxu0 0.0
    %1846 = vmatprep.mubr.f32.mxu0 0.0
    %1847 = vmatmul.mubr.f32.gmra.mrb[0].mxu0 %v1706
    %v1848 = vpop.f32.mrb[0].mxu0
    %v1849 = vadd.f32 %v1709, %v1848
    %v1850 = vpop.f32.mrb[0].mxu0
    %v1851 = vadd.f32 %v1710, %v1850
    %1852 = vdwg.mxu0
    %v1853 = vxor.u32 %v1778, 2147483648
    %v1854 = vxor.u32 %v1780, 2147483648
    %v1855 = vxor.u32 %v1849, 2147483648
    %v1856 = vmul.f32 %v1853, 1.442695
    %v1857 = vpow.pop %v1856
    %v1858 = vmul.f32 %v1854, 1.442695
    %v1859 = vpow.pop %v1858
    %v1860 = vmul.f32 %v1855, 1.442695
    %v1861 = vpow.pop %v1860
    %v1862 = vadd.f32 %v1857, 1.0
    %v1863 = vadd.f32 %v1859, 1.0
    %v1864 = vadd.f32 %v1861, 1.0
    %v1865 = vrcp.pop %v1862
    %v1866 = vmul.f32 1.0, %v1865
    %v1867 = vrcp.pop %v1863
    %v1868 = vmul.f32 1.0, %v1867
    %v1869 = vrcp.pop %v1864
    %v1870 = vmul.f32 1.0, %v1869
    %v1871 = vtanh.pop %v1851
    %v1872 = vmul.f32 %v1868, %v1704
    %v1873 = vmul.f32 %v1866, %v1871
    %v1874 = vadd.f32 %v1872, %v1873
    %v1875 = vtanh.pop %v1874
    %v1876 = vmul.f32 %v1870, %v1875
    %v1877 = vld [vmem:[%s5] sm:$0xff]
    %v1878 = vld [vmem:[%s5 + $0x8] sm:$0xff]
    %v1879 = vld [vmem:[%s5 + $0x10] sm:$0xff]
    %v1880 = vld [vmem:[%s5 + $0x18] sm:$0xff]
    %v1881 = vld [vmem:[%s5 + $0x20] sm:$0xff]
    %v1882 = vld [vmem:[%s5 + $0x28] sm:$0xff]
    %v1883 = vld [vmem:[%s5 + $0x30] sm:$0xff]
    %v1884 = vld [vmem:[%s5 + $0x38] sm:$0xff]
    %v1885 = vld [vmem:[%s6] sm:$0x1]
    %v1887 = vlaneseq
    %v1888 = vshrl.u32 %v1887, 7
    %v1889 = vsub.s32 0, %v1888
    %v1890 = vrot.slane %v1885, %v1889
    %1893 = vrot.lane.b32.xlu0 %v1876, 64
    %v1894 = vpop.permute.xlu0 %1893
    %vm1895 = vcmask 523264
    %v1896 = vsel %vm1895, %v1894, 0
    %1898 = vmatprep.subr.mxu0 0.0
    %1899 = vmatpush1.msra.mxu0 %v1877
    %1900 = vmatprep.subr.mxu0 0.0
    %1901 = vmatpush1.msra.mxu0 %v1878
    %1902 = vmatprep.subr.mxu0 0.0
    %1903 = vmatpush1.msra.mxu0 %v1879
    %1904 = vmatprep.subr.mxu0 0.0
    %1905 = vmatpush1.msra.mxu0 %v1880
    %1906 = vmatprep.subr.mxu0 0.0
    %1907 = vmatpush1.msra.mxu0 %v1881
    %1908 = vmatprep.subr.mxu0 0.0
    %1909 = vmatpush1.msra.mxu0 %v1882
    %1910 = vmatprep.subr.mxu0 0.0
    %1911 = vmatpush1.msra.mxu0 %v1883
    %1912 = vmatprep.subr.mxu0 0.0
    %1913 = vmatpush1.msra.mxu0 %v1884
    %1914 = vmatprep.subr.mxu0 0.0
    %1915 = vmatpush1.msra.mxu0 0.0
    %1916 = vmatprep.subr.mxu0 0.0
    %1917 = vmatpush1.msra.mxu0 0.0
    %1918 = vmatprep.subr.mxu0 0.0
    %1919 = vmatpush1.msra.mxu0 0.0
    %1920 = vmatprep.subr.mxu0 0.0
    %1921 = vmatpush1.msra.mxu0 0.0
    %1922 = vmatprep.subr.mxu0 0.0
    %1923 = vmatpush1.msra.mxu0 0.0
    %1924 = vmatprep.subr.mxu0 0.0
    %1925 = vmatpush1.msra.mxu0 0.0
    %1926 = vmatprep.subr.mxu0 0.0
    %1927 = vmatpush1.msra.mxu0 0.0
    %1928 = vmatprep.subr.mxu0 0.0
    %1929 = vmatpush1.msra.mxu0 0.0
    %1930 = vmatprep.subr.mxu0 0.0
    %1931 = vmatpush1.msra.mxu0 0.0
    %1932 = vmatprep.subr.mxu0 0.0
    %1933 = vmatpush1.msra.mxu0 0.0
    %1934 = vmatprep.subr.mxu0 0.0
    %1935 = vmatpush1.msra.mxu0 0.0
    %1936 = vmatprep.subr.mxu0 0.0
    %1937 = vmatpush1.msra.mxu0 0.0
    %1938 = vmatprep.subr.mxu0 0.0
    %1939 = vmatpush1.msra.mxu0 0.0
    %1940 = vmatprep.subr.mxu0 0.0
    %1941 = vmatpush1.msra.mxu0 0.0
    %1942 = vmatprep.subr.mxu0 0.0
    %1943 = vmatpush1.msra.mxu0 0.0
    %1944 = vmatprep.subr.mxu0 0.0
    %1945 = vmatpush1.msra.mxu0 0.0
    %1946 = vmatprep.subr.mxu0 0.0
    %1947 = vmatpush1.msra.mxu0 0.0
    %1948 = vmatprep.subr.mxu0 0.0
    %1949 = vmatpush1.msra.mxu0 0.0
    %1950 = vmatprep.subr.mxu0 0.0
    %1951 = vmatpush1.msra.mxu0 0.0
    %1952 = vmatprep.subr.mxu0 0.0
    %1953 = vmatpush1.msra.mxu0 0.0
    %1954 = vmatprep.subr.mxu0 0.0
    %1955 = vmatpush1.msra.mxu0 0.0
    %1956 = vmatprep.subr.mxu0 0.0
    %1957 = vmatpush1.msra.mxu0 0.0
    %1958 = vmatprep.subr.mxu0 0.0
    %1959 = vmatpush1.msra.mxu0 0.0
    %1960 = vmatprep.subr.mxu0 0.0
    %1961 = vmatpush1.msra.mxu0 0.0
    %1962 = vmatprep.mubr.f32.mxu0 0.0
    %1963 = vmatmul.mubr.f32.gmra.mrb[0].mxu0 %v1896
    %v1964 = vpop.f32.mrb[0].mxu0
    %v1965 = vadd.f32 %v1890, %v1964
    %v1966 = vpop.f32.mrb[0].mxu0
    %1967 = vdwg.mxu0
    %v1968 = vmax.f32 %v1965, 0.0
    %v1969 = vld [vmem:[%s7] sm:$0xff]
    %v1970 = vld [vmem:[%s7 + $0x8] sm:$0xff]
    %v1971 = vld [vmem:[%s7 + $0x10] sm:$0xff]
    %v1972 = vld [vmem:[%s7 + $0x18] sm:$0xff]
    %v1973 = vld [vmem:[%s7 + $0x20] sm:$0xff]
    %v1974 = vld [vmem:[%s7 + $0x28] sm:$0xff]
    %v1975 = vld [vmem:[%s7 + $0x30] sm:$0xff]
    %v1976 = vld [vmem:[%s7 + $0x38] sm:$0xff]
    %v1977 = vld [vmem:[%s8] sm:$0x1]
    %v1979 = vlaneseq
    %v1980 = vshrl.u32 %v1979, 7
    %v1981 = vsub.s32 0, %v1980
    %v1982 = vrot.slane %v1977, %v1981
    %v1985 = vsel %vm1895, %v1968, 0
    %1987 = vmatprep.subr.mxu0 0.0
    %1988 = vmatpush1.msra.mxu0 %v1969
    %1989 = vmatprep.subr.mxu0 0.0
    %1990 = vmatpush1.msra.mxu0 %v1970
    %1991 = vmatprep.subr.mxu0 0.0
    %1992 = vmatpush1.msra.mxu0 %v1971
    %1993 = vmatprep.subr.mxu0 0.0
    %1994 = vmatpush1.msra.mxu0 %v1972
    %1995 = vmatprep.subr.mxu0 0.0
    %1996 = vmatpush1.msra.mxu0 %v1973
    %1997 = vmatprep.subr.mxu0 0.0
    %1998 = vmatpush1.msra.mxu0 %v1974
    %1999 = vmatprep.subr.mxu0 0.0
    %2000 = vmatpush1.msra.mxu0 %v1975
    %2001 = vmatprep.subr.mxu0 0.0
    %2002 = vmatpush1.msra.mxu0 %v1976
    %2003 = vmatprep.subr.mxu0 0.0
    %2004 = vmatpush1.msra.mxu0 0.0
    %2005 = vmatprep.subr.mxu0 0.0
    %2006 = vmatpush1.msra.mxu0 0.0
    %2007 = vmatprep.subr.mxu0 0.0
    %2008 = vmatpush1.msra.mxu0 0.0
    %2009 = vmatprep.subr.mxu0 0.0
    %2010 = vmatpush1.msra.mxu0 0.0
    %2011 = vmatprep.subr.mxu0 0.0
    %2012 = vmatpush1.msra.mxu0 0.0
    %2013 = vmatprep.subr.mxu0 0.0
    %2014 = vmatpush1.msra.mxu0 0.0
    %2015 = vmatprep.subr.mxu0 0.0
    %2016 = vmatpush1.msra.mxu0 0.0
    %2017 = vmatprep.subr.mxu0 0.0
    %2018 = vmatpush1.msra.mxu0 0.0
    %2019 = vmatprep.subr.mxu0 0.0
    %2020 = vmatpush1.msra.mxu0 0.0
    %2021 = vmatprep.subr.mxu0 0.0
    %2022 = vmatpush1.msra.mxu0 0.0
    %2023 = vmatprep.subr.mxu0 0.0
    %2024 = vmatpush1.msra.mxu0 0.0
    %2025 = vmatprep.subr.mxu0 0.0
    %2026 = vmatpush1.msra.mxu0 0.0
    %2027 = vmatprep.subr.mxu0 0.0
    %2028 = vmatpush1.msra.mxu0 0.0
    %2029 = vmatprep.subr.mxu0 0.0
    %2030 = vmatpush1.msra.mxu0 0.0
    %2031 = vmatprep.subr.mxu0 0.0
    %2032 = vmatpush1.msra.mxu0 0.0
    %2033 = vmatprep.subr.mxu0 0.0
    %2034 = vmatpush1.msra.mxu0 0.0
    %2035 = vmatprep.subr.mxu0 0.0
    %2036 = vmatpush1.msra.mxu0 0.0
    %2037 = vmatprep.subr.mxu0 0.0
    %2038 = vmatpush1.msra.mxu0 0.0
    %2039 = vmatprep.subr.mxu0 0.0
    %2040 = vmatpush1.msra.mxu0 0.0
    %2041 = vmatprep.subr.mxu0 0.0
    %2042 = vmatpush1.msra.mxu0 0.0
    %2043 = vmatprep.subr.mxu0 0.0
    %2044 = vmatpush1.msra.mxu0 0.0
    %2045 = vmatprep.subr.mxu0 0.0
    %2046 = vmatpush1.msra.mxu0 0.0
    %2047 = vmatprep.subr.mxu0 0.0
    %2048 = vmatpush1.msra.mxu0 0.0
    %2049 = vmatprep.subr.mxu0 0.0
    %2050 = vmatpush1.msra.mxu0 0.0
    %2051 = vmatprep.mubr.f32.mxu0 0.0
    %2052 = vmatmul.mubr.f32.gmra.mrb[0].mxu0 %v1985
    %v2053 = vpop.f32.mrb[0].mxu0
    %v2054 = vadd.f32 %v1982, %v2053
    %v2055 = vpop.f32.mrb[0].mxu0
    %2056 = vdwg.mxu0
    %vm2057 = vcmask 64512
    %2058 = vst.msk [vmem:[%s9] sm:$0xff] %vm2057, %v2054
    // Predicated region
    $region42: #{garch_lstm_forward.1} parent=1 // pred_check
      _
    $region43: #{garch_lstm_forward.1} parent=1 // pred_check_branch
      %2060 = sbr.rel (0) target = $region45
    $region44: #{garch_lstm_forward.1} parent=1 // pred_region
      _
    $region45: #{garch_lstm_forward.1} parent=1 // pred_fallthru
      _
    // Predicated region
    $region46: #{garch_lstm_forward.1} parent=1 // pred_check
      _
    $region47: #{garch_lstm_forward.1} parent=1 // pred_check_branch
      %2062 = sbr.rel (0) target = $region49
    $region48: #{garch_lstm_forward.1} parent=1 // pred_region
      _
    $region49: #{garch_lstm_forward.1} parent=1 // pred_fallthru
      _
    %2063 = vsyncpa [#allocation4], 1

</llo_original>
